<compile_context>
chip_gen: v7x
topology: tpu7x:2x2x1
jax: 0.10.0
libtpu: 0.0.40
codegen_flags: <defaults>
</compile_context>

<pallas_src>
import functools

import numpy as np
import jax
import jax.numpy as jnp
from jax import lax
from jax.experimental import pallas as pl
from jax.experimental.pallas import tpu as pltpu

_NEG_HALF_LOG_2PI = float(-0.5 * np.log(2.0 * np.pi))
_LEAKY_SLOPE = 0.01  # F.leaky_relu default negative_slope

# Mixed-prior constants (sigma_wide=1.0, sigma_narrow=0.002, frac=0.5) with every
# divide folded into a compile-time reciprocal (VALU, not the single EUP slot).
_SIGMA_WIDE = 1.0
_SIGMA_NARROW = 0.002
_FRAC = 0.5
_C_WIDE = _FRAC / _SIGMA_WIDE
_C_NARROW = (1.0 - _FRAC) / _SIGMA_NARROW
_A_WIDE = -0.5 / (_SIGMA_WIDE * _SIGMA_WIDE)
_A_NARROW = -0.5 / (_SIGMA_NARROW * _SIGMA_NARROW)
_A_DELTA = _A_NARROW - _A_WIDE          # < 0, so exp(_A_DELTA * v^2) never overflows


# ---------------------------------------------------------------------------
# Kernel: one (n, k) grid step of a BayesLinear layer (weight path only).
# ---------------------------------------------------------------------------
def _bayes_linear_kernel(x_ref, wmu_ref, wrho_ref, weps_ref,
                         y_ref, logq_ref, logp_ref,
                         lq_acc, lp_acc,
                         *, tk, k_tiles):
    k = pl.program_id(1)

    # ---- sample this [tk, tn] weight tile --------------------------------
    w_mu = wmu_ref[...]
    e = jnp.exp(wrho_ref[...])
    # softplus, module formula (rho initialized in [-5,-2]; a drift-proof variant
    # would be jnp.logaddexp(0, rho), but it must change in kernel AND reference).
    w_sigma = jnp.log(1.0 + e)
    # exp(-sigma) == 1/(1+e): approx vrcp + VALU square replaces a full EUP exp.
    inv_1pe = pl.reciprocal(1.0 + e, approx=True)
    exp_m2sig = inv_1pe * inv_1pe                      # exp(-2*sigma)
    w_noise = w_sigma * weps_ref[...].astype(jnp.float32)   # sigma * eps
    weight = w_mu + w_noise                            # [tk, tn]

    # ---- posterior / prior partial sums (all f32) -------------------------
    # module's log_gaussian_logsigma with (x-mu) == sigma*eps:
    #   -0.5*log(2pi) - sigma - 0.5*(sigma*eps)^2 * exp(-2*sigma)
    lq_tile = jnp.sum(
        _NEG_HALF_LOG_2PI - w_sigma - 0.5 * (w_noise * w_noise) * exp_m2sig,
        keepdims=True)                                 # (1, 1)
    # mixed prior, factored LSE: 1 exp + 1 log per element.
    v2 = weight * weight
    lp_tile = jnp.sum(
        _A_WIDE * v2 + jnp.log(_C_WIDE + _C_NARROW * jnp.exp(_A_DELTA * v2)),
        keepdims=True)                                 # (1, 1)

    # ---- MXU partial product; x resident, slice the K chunk in-kernel -----
    if k_tiles == 1:
        x_blk = x_ref[...]
    else:
        x_blk = x_ref[:, pl.ds(pl.multiple_of(k * tk, 128), tk)]
    part = lax.dot_general(x_blk, weight,
                           dimension_numbers=(((1,), (0,)), ((), ())),
                           preferred_element_type=jnp.float32)

    @pl.when(k == 0)
    def _init():
        lq_acc[...] = lq_tile
        lp_acc[...] = lp_tile
        y_ref[...] = part

    @pl.when(k != 0)
    def _accumulate():
        lq_acc[...] += lq_tile
        lp_acc[...] += lp_tile
        y_ref[...] += part

    @pl.when(k == k_tiles - 1)
    def _finalize():   # single masked store per N tile instead of one per K step
        logq_ref[...] = jnp.reshape(lq_acc[...], (1, 1, 1))
        logp_ref[...] = jnp.reshape(lp_acc[...], (1, 1, 1))


# ---------------------------------------------------------------------------
# Tile / VMEM sizing helpers (generation-aware, with safe fallbacks).
# ---------------------------------------------------------------------------
def _pick_tile(dim, max_tile, *, min_tiles=1):
    """Largest multiple-of-128 divisor of `dim` <= max_tile; with min_tiles=2 the
    tile is additionally capped so at least 2 tiles exist (v7x megacore)."""
    if dim % 128 != 0:
        # TODO(synk): pad non-128-multiple layer widths in the wrapper; the
        # full-dim fallback requests weight-sized VMEM blocks for big layers.
        return dim
    cap = min(max_tile, dim)
    if min_tiles > 1 and dim >= min_tiles * 128:
        cap = min(cap, dim // min_tiles)
    best = 128
    t = 256
    while t <= cap:
        if dim % t == 0:
            best = t
        t += 128
    return best


def _default_max_tile():
    # 1024-wide tiles only when the core has >=96 MiB VMEM (v5e/v6e, fewer grid
    # steps / DMA descriptors); keep <=512 on v7x (64 MiB/TC) or if unknown.
    try:
        if int(pltpu.get_tpu_info().vmem_capacity_bytes) >= 96 * (1 << 20):
            return 1024
    except Exception:
        pass
    return 512


def _vmem_limit_bytes(batch, in_features, tk, tn):
    tile = tk * tn * 4
    need = (2 * batch * in_features * 4      # resident x (conservative x2)
            + 2 * 2 * tile                   # w_mu, w_rho double-buffered
            + tile                           # w_eps (bf16) double-buffered
            + 2 * batch * tn * 4             # resident y block
            + 10 * tile)                     # live elementwise f32 temporaries
    try:
        phys = int(pltpu.get_tpu_info().vmem_capacity_bytes)
    except Exception:
        phys = 64 * (1 << 20)
    return int(min(phys * 7 // 8, max(32 * (1 << 20), 2 * need)))


# ---------------------------------------------------------------------------
# Wrappers.
# ---------------------------------------------------------------------------
def bayes_linear_forward(x, w_mu, w_rho, b_mu, b_rho, w_eps, b_eps,
                         *, max_tile_k=None, max_tile_n=None):
    """One BayesLinear layer.  Params / w_eps use the [in_features, out_features]
    layout (transpose of torch's nn.Linear storage) so the sampled weight tile is
    already [K, N].  Returns (y, log_q, log_p, kl)."""
    batch, in_features = x.shape
    kf, out_features = w_mu.shape
    assert kf == in_features

    if max_tile_k is None:
        max_tile_k = _default_max_tile()
    if max_tile_n is None:
        max_tile_n = _default_max_tile()

    tk = _pick_tile(in_features, max_tile_k)
    tn = _pick_tile(out_features, max_tile_n, min_tiles=2)   # >=2 N tiles for v7x
    k_tiles = in_features // tk
    n_tiles = out_features // tn

    kernel = functools.partial(_bayes_linear_kernel, tk=tk, k_tiles=k_tiles)

    flops = 2 * batch * in_features * out_features + 16 * in_features * out_features
    transcendentals = 5 * in_features * out_features          # 2 exp, 2 log, 1 rcp
    bytes_accessed = ((4 + 4 + 2) * in_features * out_features  # w_mu/w_rho f32, eps bf16
                      + 4 * batch * in_features                 # x (one resident DMA)
                      + 4 * batch * out_features)               # y

    y_acc, logq_part, logp_part = pl.pallas_call(
        kernel,
        out_shape=(
            jax.ShapeDtypeStruct((batch, out_features), jnp.float32),
            jax.ShapeDtypeStruct((n_tiles, 1, 1), jnp.float32),
            jax.ShapeDtypeStruct((n_tiles, 1, 1), jnp.float32),
        ),
        grid=(n_tiles, k_tiles),
        in_specs=[
            pl.BlockSpec((batch, in_features), lambda n, k: (0, 0)),  # x (resident)
            pl.BlockSpec((tk, tn), lambda n, k: (k, n)),              # w_mu
            pl.BlockSpec((tk, tn), lambda n, k: (k, n)),              # w_rho
            pl.BlockSpec((tk, tn), lambda n, k: (k, n)),              # w_eps (bf16)
        ],
        out_specs=(
            pl.BlockSpec((batch, tn), lambda n, k: (0, n)),           # y (resident over k)
            pl.BlockSpec((1, 1, 1), lambda n, k: (n, 0, 0)),          # log_q partial
            pl.BlockSpec((1, 1, 1), lambda n, k: (n, 0, 0)),          # log_p partial
        ),
        scratch_shapes=[pltpu.VMEM((1, 1), jnp.float32),
                        pltpu.VMEM((1, 1), jnp.float32)],
        compiler_params=pltpu.CompilerParams(
            # N axis: per-tile outputs, no cross-N state -> megacore sharding.
            # K axis: reduction into resident accumulators -> arbitrary.
            dimension_semantics=("parallel", "arbitrary"),
            vmem_limit_bytes=_vmem_limit_bytes(batch, in_features, tk, tn),
        ),
        cost_estimate=pl.CostEstimate(
            flops=int(flops),
            transcendentals=int(transcendentals),
            bytes_accessed=int(bytes_accessed),
        ),
    )(x, w_mu, w_rho, w_eps)

    # Bias path is O(N): sample, KL terms and add handled by XLA in the wrapper
    # (verbatim module formulas), trimming three per-step DMAs from the kernel.
    b_eps_f = b_eps.astype(jnp.float32)
    b_sigma = jnp.log(1.0 + jnp.exp(b_rho))
    b_noise = b_sigma * b_eps_f
    bias = b_mu + b_noise
    lq_b = jnp.sum(_NEG_HALF_LOG_2PI - b_sigma
                   - b_noise ** 2 / (2.0 * jnp.exp(b_sigma) ** 2))
    lp_b = jnp.sum(jnp.log(
        _FRAC * jnp.exp(-0.5 * (bias / _SIGMA_WIDE) ** 2) / _SIGMA_WIDE
        + (1.0 - _FRAC) * jnp.exp(-0.5 * (bias / _SIGMA_NARROW) ** 2) / _SIGMA_NARROW))

    log_q = jnp.sum(logq_part) + lq_b
    log_p = jnp.sum(logp_part) + lp_b
    y = y_acc + bias
    return y, log_q, log_p, log_q - log_p


def _draw_eps(key, in_features, out_features):
    kw, kb = jax.random.split(key)
    # bf16 halves eps' share of the HBM weight stream; the reference uses the
    # same bf16 values, so the noise is bit-identical in both paths.
    w_eps = jax.random.normal(kw, (in_features, out_features),
                              dtype=jnp.float32).astype(jnp.bfloat16)
    b_eps = jax.random.normal(kb, (out_features,),
                              dtype=jnp.float32).astype(jnp.bfloat16)
    return w_eps, b_eps


def bayes_mlp_forward(x, params, key, *, max_tile_k=None, max_tile_n=None):
    """BayesMLP.forward: BayesLinear layers, leaky_relu between them, summed kl."""
    layer_keys = jax.random.split(key, len(params))
    h = x
    kl_total = jnp.float32(0.0)
    stats = []
    for i, (p, lk) in enumerate(zip(params, layer_keys)):
        last = i == len(params) - 1
        w_eps, b_eps = _draw_eps(lk, *p["w_mu"].shape)
        y, log_q, log_p, kl = bayes_linear_forward(
            h, p["w_mu"], p["w_rho"], p["b_mu"], p["b_rho"], w_eps, b_eps,
            max_tile_k=max_tile_k, max_tile_n=max_tile_n)
        kl_total = kl_total + kl
        stats.append((log_q, log_p, kl))
        # leaky_relu is O(batch*N): done by XLA (bias add moved out of the kernel,
        # so the activation can no longer be fused into the last K step).
        h = y if last else jnp.where(y >= 0.0, y, _LEAKY_SLOPE * y)
    # TODO(synk): for deeper stacks, prefetch the next layer's w_mu/w_rho with a
    # cross-pallas_call DMA future so weight loads overlap the previous layer.
    return h, kl_total, stats


def init_bayes_linear(key, in_features, out_features):
    # Same init distributions as the PyTorch module, stored transposed ([in, out])
    # so the sampled weight feeds the MXU without a per-call transpose.
    k1, k2, k3, k4 = jax.random.split(key, 4)
    stdv = 1e-4
    return {
        "w_mu": jax.random.uniform(k1, (in_features, out_features),
                                   minval=-stdv, maxval=stdv, dtype=jnp.float32),
        "w_rho": jax.random.uniform(k2, (in_features, out_features),
                                    minval=-5.0, maxval=-2.0, dtype=jnp.float32),
        "b_mu": jax.random.uniform(k3, (out_features,),
                                   minval=-0.01, maxval=0.01, dtype=jnp.float32),
        "b_rho": jax.random.uniform(k4, (out_features,),
                                    minval=-5.0, maxval=-2.0, dtype=jnp.float32),
    }


# ---------------------------------------------------------------------------
# Pure-JAX reference (torch formulas verbatim), for validation only.
# ---------------------------------------------------------------------------
def _reference_layer(x, w_mu, w_rho, b_mu, b_rho, w_eps, b_eps):
    w_eps = w_eps.astype(jnp.float32)
    b_eps = b_eps.astype(jnp.float32)
    w_sigma = jnp.log(1.0 + jnp.exp(w_rho))
    b_sigma = jnp.log(1.0 + jnp.exp(b_rho))
    weight = w_mu + w_sigma * w_eps        # [K, N]
    bias = b_mu + b_sigma * b_eps          # [N]

    def mixed(v, sw=1.0, sn=0.002, f=0.5):
        return jnp.log(f * jnp.exp(-0.5 * (v / sw) ** 2) / sw
                       + (1.0 - f) * jnp.exp(-0.5 * (v / sn) ** 2) / sn)

    def lgl(v, mu, ls):
        return _NEG_HALF_LOG_2PI - ls - (v - mu) ** 2 / (2.0 * jnp.exp(ls) ** 2)

    log_p = jnp.sum(mixed(weight)) + jnp.sum(mixed(bias))
    log_q = jnp.sum(lgl(weight, w_mu, w_sigma)) + jnp.sum(lgl(bias, b_mu, b_sigma))
    y = x @ weight + bias
    return y, log_q, log_p, log_q - log_p


def _reference_mlp(x, params, key):
    layer_keys = jax.random.split(key, len(params))
    h = x
    kl_total = jnp.float32(0.0)
    stats = []
    for i, (p, lk) in enumerate(zip(params, layer_keys)):
        w_eps, b_eps = _draw_eps(lk, *p["w_mu"].shape)
        y, log_q, log_p, kl = _reference_layer(
            h, p["w_mu"], p["w_rho"], p["b_mu"], p["b_rho"], w_eps, b_eps)
        kl_total = kl_total + kl
        stats.append((log_q, log_p, kl))
        h = y if i == len(params) - 1 else jnp.where(y >= 0.0, y, _LEAKY_SLOPE * y)
    return h, kl_total, stats


if __name__ == "__main__":
    batch = 8
    input_size, hidden_dim, output_size = 256, 256, 128

    root = jax.random.PRNGKey(0)
    k_x, k_params, k_eps = jax.random.split(root, 3)

    dims = [(input_size, hidden_dim), (hidden_dim, hidden_dim),
            (hidden_dim, hidden_dim), (hidden_dim, output_size)]
    param_keys = jax.random.split(k_params, len(dims))
    params = [init_bayes_linear(pk, d_in, d_out)
              for pk, (d_in, d_out) in zip(param_keys, dims)]

    x = jax.random.normal(k_x, (batch, input_size), dtype=jnp.float32)

    # max_tile=128 so the 256-wide layers exercise multi-tile grids along both the
    # parallel (N) and reduction (K) axes; production default is generation-aware.
    fwd = jax.jit(functools.partial(bayes_mlp_forward, max_tile_k=128, max_tile_n=128))
    y, kl, stats = fwd(x, params, k_eps)
    jax.block_until_ready((y, kl))

    # Validate against the pure-JAX reference using identical (bf16) eps draws.
    y_ref, kl_ref, stats_ref = _reference_mlp(x, params, k_eps)

    # y: loose tolerance covers MXU precision / K-tiling accumulation-order diffs.
    np.testing.assert_allclose(np.asarray(y), np.asarray(y_ref), rtol=5e-3, atol=5e-3)
    # KL terms: tight relative tolerance on ~1e4-1e5 magnitudes; small atol covers
    # the approx-reciprocal exp(-2*sigma) path.
    np.testing.assert_allclose(float(kl), float(kl_ref), rtol=5e-4, atol=2.0)
    for (lq, lp, _), (lq_r, lp_r, _) in zip(stats, stats_ref):
        np.testing.assert_allclose(float(lq), float(lq_r), rtol=5e-4, atol=2.0)
        np.testing.assert_allclose(float(lp), float(lp_r), rtol=5e-4, atol=2.0)

    print("KERNEL_OK")
</pallas_src>

<mosaic_0001>
module attributes {stable_mosaic.version = 11 : i64} {
  func.func @_bayes_linear_kernel(%arg0: i32, %arg1: i32, %arg2: memref<8x256xf32, #tpu.memory_space<vmem>>, %arg3: memref<128x128xf32, #tpu.memory_space<vmem>>, %arg4: memref<128x128xf32, #tpu.memory_space<vmem>>, %arg5: memref<128x128xbf16, #tpu.memory_space<vmem>>, %arg6: memref<8x128xf32, #tpu.memory_space<vmem>>, %arg7: memref<1x1x1xf32, #tpu.memory_space<vmem>>, %arg8: memref<1x1x1xf32, #tpu.memory_space<vmem>>, %arg9: memref<1x1xf32, #tpu.memory_space<vmem>>, %arg10: memref<1x1xf32, #tpu.memory_space<vmem>>) attributes {dimension_semantics = [#tpu.dimension_semantics<parallel>, #tpu.dimension_semantics<arbitrary>], iteration_bounds = array<i64: 2, 2>, scalar_prefetch = 0 : i64, scratch_operands = 2 : i64, tpu.core_type = #tpu.core_type<tc>, window_params = [{pipeline_mode = #tpu.pipeline_mode<synchronous>, transform_indices = @transform_0, window_bounds = array<i64: 8, 256>}, {transform_indices = @transform_1, window_bounds = array<i64: 128, 128>}, {transform_indices = @transform_2, window_bounds = array<i64: 128, 128>}, {transform_indices = @transform_3, window_bounds = array<i64: 128, 128>}, {transform_indices = @transform_4, window_bounds = array<i64: 8, 128>}, {transform_indices = @transform_5, window_bounds = array<i64: 1, 1, 1>}, {transform_indices = @transform_6, window_bounds = array<i64: 1, 1, 1>}]} {
    %c0 = arith.constant 0 : index
    %c0_0 = arith.constant 0 : index
    %0 = vector.load %arg3[%c0, %c0_0] : memref<128x128xf32, #tpu.memory_space<vmem>>, vector<128x128xf32>
    %c0_1 = arith.constant 0 : index
    %c0_2 = arith.constant 0 : index
    %1 = vector.load %arg4[%c0_1, %c0_2] : memref<128x128xf32, #tpu.memory_space<vmem>>, vector<128x128xf32>
    %2 = math.exp %1 : vector<128x128xf32>
    %cst = arith.constant 1.000000e+00 : f32
    %3 = vector.broadcast %cst : f32 to vector<128x128xf32>
    %4 = arith.addf %3, %2 : vector<128x128xf32>
    %5 = math.log %4 : vector<128x128xf32>
    %cst_3 = arith.constant 1.000000e+00 : f32
    %6 = vector.broadcast %cst_3 : f32 to vector<128x128xf32>
    %7 = arith.addf %6, %2 : vector<128x128xf32>
    %8 = tpu.reciprocal %7 {approx = true} : vector<128x128xf32> -> vector<128x128xf32>
    %9 = arith.mulf %8, %8 : vector<128x128xf32>
    %c0_4 = arith.constant 0 : index
    %c0_5 = arith.constant 0 : index
    %10 = vector.load %arg5[%c0_4, %c0_5] : memref<128x128xbf16, #tpu.memory_space<vmem>>, vector<128x128xbf16>
    %11 = arith.extf %10 : vector<128x128xbf16> to vector<128x128xf32>
    %12 = arith.mulf %5, %11 : vector<128x128xf32>
    %13 = arith.addf %0, %12 : vector<128x128xf32>
    %cst_6 = arith.constant -0.918938517 : f32
    %14 = vector.broadcast %cst_6 : f32 to vector<128x128xf32>
    %15 = arith.subf %14, %5 : vector<128x128xf32>
    %16 = arith.mulf %12, %12 : vector<128x128xf32>
    %cst_7 = arith.constant 5.000000e-01 : f32
    %17 = vector.broadcast %cst_7 : f32 to vector<128x128xf32>
    %18 = arith.mulf %17, %16 : vector<128x128xf32>
    %19 = arith.mulf %18, %9 : vector<128x128xf32>
    %20 = arith.subf %15, %19 : vector<128x128xf32>
    %21 = vector.shape_cast %20 : vector<128x128xf32> to vector<1x128x128xf32>
    %cst_8 = arith.constant dense<0.000000e+00> : vector<1xf32>
    %22 = vector.multi_reduction <add>, %21, %cst_8 [1, 2] : vector<1x128x128xf32> to vector<1xf32>
    %23 = vector.shape_cast %22 : vector<1xf32> to vector<1x1x1xf32>
    %24 = vector.extract %23[0, 0, 0] : f32 from vector<1x1x1xf32>
    %25 = vector.broadcast %24 : f32 to vector<1x1xf32>
    %26 = arith.mulf %13, %13 : vector<128x128xf32>
    %cst_9 = arith.constant -5.000000e-01 : f32
    %27 = vector.broadcast %cst_9 : f32 to vector<128x128xf32>
    %28 = arith.mulf %27, %26 : vector<128x128xf32>
    %cst_10 = arith.constant -124999.5 : f32
    %29 = vector.broadcast %cst_10 : f32 to vector<128x128xf32>
    %30 = arith.mulf %29, %26 : vector<128x128xf32>
    %31 = math.exp %30 : vector<128x128xf32>
    %cst_11 = arith.constant 2.500000e+02 : f32
    %32 = vector.broadcast %cst_11 : f32 to vector<128x128xf32>
    %33 = arith.mulf %32, %31 : vector<128x128xf32>
    %cst_12 = arith.constant 5.000000e-01 : f32
    %34 = vector.broadcast %cst_12 : f32 to vector<128x128xf32>
    %35 = arith.addf %34, %33 : vector<128x128xf32>
    %36 = math.log %35 : vector<128x128xf32>
    %37 = arith.addf %28, %36 : vector<128x128xf32>
    %38 = vector.shape_cast %37 : vector<128x128xf32> to vector<1x128x128xf32>
    %cst_13 = arith.constant dense<0.000000e+00> : vector<1xf32>
    %39 = vector.multi_reduction <add>, %38, %cst_13 [1, 2] : vector<1x128x128xf32> to vector<1xf32>
    %40 = vector.shape_cast %39 : vector<1xf32> to vector<1x1x1xf32>
    %41 = vector.extract %40[0, 0, 0] : f32 from vector<1x1x1xf32>
    %42 = vector.broadcast %41 : f32 to vector<1x1xf32>
    %c128_i32 = arith.constant 128 : i32
    %43 = arith.muli %arg1, %c128_i32 : i32
    %44 = tpu.assume_multiple %43, 128 : i32
    %c0_14 = arith.constant 0 : index
    %45 = arith.index_cast %44 : i32 to index
    %46 = vector.load %arg2[%c0_14, %45] : memref<8x256xf32, #tpu.memory_space<vmem>>, vector<8x128xf32>
    %cst_15 = arith.constant dense<0.000000e+00> : vector<8x128xf32>
    %47 = tpu.matmul %46, %13, %cst_15 {dimension_numbers = #tpu.dot_dimension_numbers<[1], [0], [0], [1], [0, 0, 1, 1], [], []>} : vector<8x128xf32>, vector<128x128xf32>, vector<8x128xf32> -> vector<8x128xf32>
    %c0_i32 = arith.constant 0 : i32
    %48 = arith.cmpi eq, %arg1, %c0_i32 : i32
    %49 = arith.extui %48 : i1 to i32
    %c0_i32_16 = arith.constant 0 : i32
    %50 = arith.cmpi ne, %49, %c0_i32_16 : i32
    scf.if %50 {
      %c0_20 = arith.constant 0 : index
      %c0_21 = arith.constant 0 : index
      %57 = vector.load %arg9[%c0_20, %c0_21] : memref<1x1xf32, #tpu.memory_space<vmem>>, vector<1x1xf32>
      tpu.vector_store %arg9[%c0_20, %c0_21], %25 {strides = array<i32>} : memref<1x1xf32, #tpu.memory_space<vmem>>, vector<1x1xf32>,
      %c0_22 = arith.constant 0 : index
      %c0_23 = arith.constant 0 : index
      %58 = vector.load %arg10[%c0_22, %c0_23] : memref<1x1xf32, #tpu.memory_space<vmem>>, vector<1x1xf32>
      tpu.vector_store %arg10[%c0_22, %c0_23], %42 {strides = array<i32>} : memref<1x1xf32, #tpu.memory_space<vmem>>, vector<1x1xf32>,
      %c0_24 = arith.constant 0 : index
      %c0_25 = arith.constant 0 : index
      %59 = vector.load %arg6[%c0_24, %c0_25] : memref<8x128xf32, #tpu.memory_space<vmem>>, vector<8x128xf32>
      tpu.vector_store %arg6[%c0_24, %c0_25], %47 {strides = array<i32>} : memref<8x128xf32, #tpu.memory_space<vmem>>, vector<8x128xf32>,
    } else {
    }
    %c0_i32_17 = arith.constant 0 : i32
    %51 = arith.cmpi ne, %arg1, %c0_i32_17 : i32
    %52 = arith.extui %51 : i1 to i32
    %c0_i32_18 = arith.constant 0 : i32
    %53 = arith.cmpi ne, %52, %c0_i32_18 : i32
    scf.if %53 {
      %c0_20 = arith.constant 0 : index
      %c0_21 = arith.constant 0 : index
      %57 = vector.load %arg9[%c0_20, %c0_21] : memref<1x1xf32, #tpu.memory_space<vmem>>, vector<1x1xf32>
      %58 = arith.addf %57, %25 : vector<1x1xf32>
      %c0_22 = arith.constant 0 : index
      %c0_23 = arith.constant 0 : index
      %59 = vector.load %arg9[%c0_22, %c0_23] : memref<1x1xf32, #tpu.memory_space<vmem>>, vector<1x1xf32>
      tpu.vector_store %arg9[%c0_22, %c0_23], %58 {strides = array<i32>} : memref<1x1xf32, #tpu.memory_space<vmem>>, vector<1x1xf32>,
      %c0_24 = arith.constant 0 : index
      %c0_25 = arith.constant 0 : index
      %60 = vector.load %arg10[%c0_24, %c0_25] : memref<1x1xf32, #tpu.memory_space<vmem>>, vector<1x1xf32>
      %61 = arith.addf %60, %42 : vector<1x1xf32>
      %c0_26 = arith.constant 0 : index
      %c0_27 = arith.constant 0 : index
      %62 = vector.load %arg10[%c0_26, %c0_27] : memref<1x1xf32, #tpu.memory_space<vmem>>, vector<1x1xf32>
      tpu.vector_store %arg10[%c0_26, %c0_27], %61 {strides = array<i32>} : memref<1x1xf32, #tpu.memory_space<vmem>>, vector<1x1xf32>,
      %c0_28 = arith.constant 0 : index
      %c0_29 = arith.constant 0 : index
      %63 = vector.load %arg6[%c0_28, %c0_29] : memref<8x128xf32, #tpu.memory_space<vmem>>, vector<8x128xf32>
      %64 = arith.addf %63, %47 : vector<8x128xf32>
      %c0_30 = arith.constant 0 : index
      %c0_31 = arith.constant 0 : index
      %65 = vector.load %arg6[%c0_30, %c0_31] : memref<8x128xf32, #tpu.memory_space<vmem>>, vector<8x128xf32>
      tpu.vector_store %arg6[%c0_30, %c0_31], %64 {strides = array<i32>} : memref<8x128xf32, #tpu.memory_space<vmem>>, vector<8x128xf32>,
    } else {
    }
    %c1_i32 = arith.constant 1 : i32
    %54 = arith.cmpi eq, %arg1, %c1_i32 : i32
    %55 = arith.extui %54 : i1 to i32
    %c0_i32_19 = arith.constant 0 : i32
    %56 = arith.cmpi ne, %55, %c0_i32_19 : i32
    scf.if %56 {
      %c0_20 = arith.constant 0 : index
      %c0_21 = arith.constant 0 : index
      %57 = vector.load %arg9[%c0_20, %c0_21] : memref<1x1xf32, #tpu.memory_space<vmem>>, vector<1x1xf32>
      %58 = vector.shape_cast %57 : vector<1x1xf32> to vector<1x1x1xf32>
      %c0_22 = arith.constant 0 : index
      %c0_23 = arith.constant 0 : index
      %c0_24 = arith.constant 0 : index
      %59 = vector.load %arg7[%c0_22, %c0_23, %c0_24] : memref<1x1x1xf32, #tpu.memory_space<vmem>>, vector<1x1x1xf32>
      tpu.vector_store %arg7[%c0_22, %c0_23, %c0_24], %58 {strides = array<i32>} : memref<1x1x1xf32, #tpu.memory_space<vmem>>, vector<1x1x1xf32>,
      %c0_25 = arith.constant 0 : index
      %c0_26 = arith.constant 0 : index
      %60 = vector.load %arg10[%c0_25, %c0_26] : memref<1x1xf32, #tpu.memory_space<vmem>>, vector<1x1xf32>
      %61 = vector.shape_cast %60 : vector<1x1xf32> to vector<1x1x1xf32>
      %c0_27 = arith.constant 0 : index
      %c0_28 = arith.constant 0 : index
      %c0_29 = arith.constant 0 : index
      %62 = vector.load %arg8[%c0_27, %c0_28, %c0_29] : memref<1x1x1xf32, #tpu.memory_space<vmem>>, vector<1x1x1xf32>
      tpu.vector_store %arg8[%c0_27, %c0_28, %c0_29], %61 {strides = array<i32>} : memref<1x1x1xf32, #tpu.memory_space<vmem>>, vector<1x1x1xf32>,
    } else {
    }
    return
  }
  func.func @transform_0(%arg0: i32, %arg1: i32) -> (i32, i32) {
    %c0_i32 = arith.constant 0 : i32
    %c0_i32_0 = arith.constant 0 : i32
    %c0_i32_1 = arith.constant 0 : i32
    return %c0_i32, %c0_i32_0 : i32, i32
  }
  func.func @transform_1(%arg0: i32, %arg1: i32) -> (i32, i32) {
    %c0_i32 = arith.constant 0 : i32
    return %arg1, %arg0 : i32, i32
  }
  func.func @transform_2(%arg0: i32, %arg1: i32) -> (i32, i32) {
    %c0_i32 = arith.constant 0 : i32
    return %arg1, %arg0 : i32, i32
  }
  func.func @transform_3(%arg0: i32, %arg1: i32) -> (i32, i32) {
    %c0_i32 = arith.constant 0 : i32
    return %arg1, %arg0 : i32, i32
  }
  func.func @transform_4(%arg0: i32, %arg1: i32) -> (i32, i32) {
    %c0_i32 = arith.constant 0 : i32
    %c0_i32_0 = arith.constant 0 : i32
    return %c0_i32, %arg0 : i32, i32
  }
  func.func @transform_5(%arg0: i32, %arg1: i32) -> (i32, i32, i32) {
    %c0_i32 = arith.constant 0 : i32
    %c0_i32_0 = arith.constant 0 : i32
    %c0_i32_1 = arith.constant 0 : i32
    return %arg0, %c0_i32, %c0_i32_0 : i32, i32, i32
  }
  func.func @transform_6(%arg0: i32, %arg1: i32) -> (i32, i32, i32) {
    %c0_i32 = arith.constant 0 : i32
    %c0_i32_0 = arith.constant 0 : i32
    %c0_i32_1 = arith.constant 0 : i32
    return %arg0, %c0_i32, %c0_i32_0 : i32, i32, i32
  }
}

module attributes {stable_mosaic.version = 11 : i64} {
  func.func @_bayes_linear_kernel(%arg0: i32, %arg1: i32, %arg2: memref<8x256xf32, #tpu.memory_space<vmem>>, %arg3: memref<128x128xf32, #tpu.memory_space<vmem>>, %arg4: memref<128x128xf32, #tpu.memory_space<vmem>>, %arg5: memref<128x128xbf16, #tpu.memory_space<vmem>>, %arg6: memref<8x128xf32, #tpu.memory_space<vmem>>, %arg7: memref<1x1x1xf32, #tpu.memory_space<vmem>>, %arg8: memref<1x1x1xf32, #tpu.memory_space<vmem>>, %arg9: memref<1x1xf32, #tpu.memory_space<vmem>>, %arg10: memref<1x1xf32, #tpu.memory_space<vmem>>) attributes {dimension_semantics = [#tpu.dimension_semantics<parallel>, #tpu.dimension_semantics<arbitrary>], iteration_bounds = array<i64: 1, 2>, scalar_prefetch = 0 : i64, scratch_operands = 2 : i64, tpu.core_type = #tpu.core_type<tc>, window_params = [{pipeline_mode = #tpu.pipeline_mode<synchronous>, transform_indices = @transform_0, window_bounds = array<i64: 8, 256>}, {transform_indices = @transform_1, window_bounds = array<i64: 128, 128>}, {transform_indices = @transform_2, window_bounds = array<i64: 128, 128>}, {transform_indices = @transform_3, window_bounds = array<i64: 128, 128>}, {transform_indices = @transform_4, window_bounds = array<i64: 8, 128>}, {transform_indices = @transform_5, window_bounds = array<i64: 1, 1, 1>}, {transform_indices = @transform_6, window_bounds = array<i64: 1, 1, 1>}]} {
    %c0 = arith.constant 0 : index
    %c0_0 = arith.constant 0 : index
    %0 = vector.load %arg3[%c0, %c0_0] : memref<128x128xf32, #tpu.memory_space<vmem>>, vector<128x128xf32>
    %c0_1 = arith.constant 0 : index
    %c0_2 = arith.constant 0 : index
    %1 = vector.load %arg4[%c0_1, %c0_2] : memref<128x128xf32, #tpu.memory_space<vmem>>, vector<128x128xf32>
    %2 = math.exp %1 : vector<128x128xf32>
    %cst = arith.constant 1.000000e+00 : f32
    %3 = vector.broadcast %cst : f32 to vector<128x128xf32>
    %4 = arith.addf %3, %2 : vector<128x128xf32>
    %5 = math.log %4 : vector<128x128xf32>
    %cst_3 = arith.constant 1.000000e+00 : f32
    %6 = vector.broadcast %cst_3 : f32 to vector<128x128xf32>
    %7 = arith.addf %6, %2 : vector<128x128xf32>
    %8 = tpu.reciprocal %7 {approx = true} : vector<128x128xf32> -> vector<128x128xf32>
    %9 = arith.mulf %8, %8 : vector<128x128xf32>
    %c0_4 = arith.constant 0 : index
    %c0_5 = arith.constant 0 : index
    %10 = vector.load %arg5[%c0_4, %c0_5] : memref<128x128xbf16, #tpu.memory_space<vmem>>, vector<128x128xbf16>
    %11 = arith.extf %10 : vector<128x128xbf16> to vector<128x128xf32>
    %12 = arith.mulf %5, %11 : vector<128x128xf32>
    %13 = arith.addf %0, %12 : vector<128x128xf32>
    %cst_6 = arith.constant -0.918938517 : f32
    %14 = vector.broadcast %cst_6 : f32 to vector<128x128xf32>
    %15 = arith.subf %14, %5 : vector<128x128xf32>
    %16 = arith.mulf %12, %12 : vector<128x128xf32>
    %cst_7 = arith.constant 5.000000e-01 : f32
    %17 = vector.broadcast %cst_7 : f32 to vector<128x128xf32>
    %18 = arith.mulf %17, %16 : vector<128x128xf32>
    %19 = arith.mulf %18, %9 : vector<128x128xf32>
    %20 = arith.subf %15, %19 : vector<128x128xf32>
    %21 = vector.shape_cast %20 : vector<128x128xf32> to vector<1x128x128xf32>
    %cst_8 = arith.constant dense<0.000000e+00> : vector<1xf32>
    %22 = vector.multi_reduction <add>, %21, %cst_8 [1, 2] : vector<1x128x128xf32> to vector<1xf32>
    %23 = vector.shape_cast %22 : vector<1xf32> to vector<1x1x1xf32>
    %24 = vector.extract %23[0, 0, 0] : f32 from vector<1x1x1xf32>
    %25 = vector.broadcast %24 : f32 to vector<1x1xf32>
    %26 = arith.mulf %13, %13 : vector<128x128xf32>
    %cst_9 = arith.constant -5.000000e-01 : f32
    %27 = vector.broadcast %cst_9 : f32 to vector<128x128xf32>
    %28 = arith.mulf %27, %26 : vector<128x128xf32>
    %cst_10 = arith.constant -124999.5 : f32
    %29 = vector.broadcast %cst_10 : f32 to vector<128x128xf32>
    %30 = arith.mulf %29, %26 : vector<128x128xf32>
    %31 = math.exp %30 : vector<128x128xf32>
    %cst_11 = arith.constant 2.500000e+02 : f32
    %32 = vector.broadcast %cst_11 : f32 to vector<128x128xf32>
    %33 = arith.mulf %32, %31 : vector<128x128xf32>
    %cst_12 = arith.constant 5.000000e-01 : f32
    %34 = vector.broadcast %cst_12 : f32 to vector<128x128xf32>
    %35 = arith.addf %34, %33 : vector<128x128xf32>
    %36 = math.log %35 : vector<128x128xf32>
    %37 = arith.addf %28, %36 : vector<128x128xf32>
    %38 = vector.shape_cast %37 : vector<128x128xf32> to vector<1x128x128xf32>
    %cst_13 = arith.constant dense<0.000000e+00> : vector<1xf32>
    %39 = vector.multi_reduction <add>, %38, %cst_13 [1, 2] : vector<1x128x128xf32> to vector<1xf32>
    %40 = vector.shape_cast %39 : vector<1xf32> to vector<1x1x1xf32>
    %41 = vector.extract %40[0, 0, 0] : f32 from vector<1x1x1xf32>
    %42 = vector.broadcast %41 : f32 to vector<1x1xf32>
    %c128_i32 = arith.constant 128 : i32
    %43 = arith.muli %arg1, %c128_i32 : i32
    %44 = tpu.assume_multiple %43, 128 : i32
    %c0_14 = arith.constant 0 : index
    %45 = arith.index_cast %44 : i32 to index
    %46 = vector.load %arg2[%c0_14, %45] : memref<8x256xf32, #tpu.memory_space<vmem>>, vector<8x128xf32>
    %cst_15 = arith.constant dense<0.000000e+00> : vector<8x128xf32>
    %47 = tpu.matmul %46, %13, %cst_15 {dimension_numbers = #tpu.dot_dimension_numbers<[1], [0], [0], [1], [0, 0, 1, 1], [], []>} : vector<8x128xf32>, vector<128x128xf32>, vector<8x128xf32> -> vector<8x128xf32>
    %c0_i32 = arith.constant 0 : i32
    %48 = arith.cmpi eq, %arg1, %c0_i32 : i32
    %49 = arith.extui %48 : i1 to i32
    %c0_i32_16 = arith.constant 0 : i32
    %50 = arith.cmpi ne, %49, %c0_i32_16 : i32
    scf.if %50 {
      %c0_20 = arith.constant 0 : index
      %c0_21 = arith.constant 0 : index
      %57 = vector.load %arg9[%c0_20, %c0_21] : memref<1x1xf32, #tpu.memory_space<vmem>>, vector<1x1xf32>
      tpu.vector_store %arg9[%c0_20, %c0_21], %25 {strides = array<i32>} : memref<1x1xf32, #tpu.memory_space<vmem>>, vector<1x1xf32>,
      %c0_22 = arith.constant 0 : index
      %c0_23 = arith.constant 0 : index
      %58 = vector.load %arg10[%c0_22, %c0_23] : memref<1x1xf32, #tpu.memory_space<vmem>>, vector<1x1xf32>
      tpu.vector_store %arg10[%c0_22, %c0_23], %42 {strides = array<i32>} : memref<1x1xf32, #tpu.memory_space<vmem>>, vector<1x1xf32>,
      %c0_24 = arith.constant 0 : index
      %c0_25 = arith.constant 0 : index
      %59 = vector.load %arg6[%c0_24, %c0_25] : memref<8x128xf32, #tpu.memory_space<vmem>>, vector<8x128xf32>
      tpu.vector_store %arg6[%c0_24, %c0_25], %47 {strides = array<i32>} : memref<8x128xf32, #tpu.memory_space<vmem>>, vector<8x128xf32>,
    } else {
    }
    %c0_i32_17 = arith.constant 0 : i32
    %51 = arith.cmpi ne, %arg1, %c0_i32_17 : i32
    %52 = arith.extui %51 : i1 to i32
    %c0_i32_18 = arith.constant 0 : i32
    %53 = arith.cmpi ne, %52, %c0_i32_18 : i32
    scf.if %53 {
      %c0_20 = arith.constant 0 : index
      %c0_21 = arith.constant 0 : index
      %57 = vector.load %arg9[%c0_20, %c0_21] : memref<1x1xf32, #tpu.memory_space<vmem>>, vector<1x1xf32>
      %58 = arith.addf %57, %25 : vector<1x1xf32>
      %c0_22 = arith.constant 0 : index
      %c0_23 = arith.constant 0 : index
      %59 = vector.load %arg9[%c0_22, %c0_23] : memref<1x1xf32, #tpu.memory_space<vmem>>, vector<1x1xf32>
      tpu.vector_store %arg9[%c0_22, %c0_23], %58 {strides = array<i32>} : memref<1x1xf32, #tpu.memory_space<vmem>>, vector<1x1xf32>,
      %c0_24 = arith.constant 0 : index
      %c0_25 = arith.constant 0 : index
      %60 = vector.load %arg10[%c0_24, %c0_25] : memref<1x1xf32, #tpu.memory_space<vmem>>, vector<1x1xf32>
      %61 = arith.addf %60, %42 : vector<1x1xf32>
      %c0_26 = arith.constant 0 : index
      %c0_27 = arith.constant 0 : index
      %62 = vector.load %arg10[%c0_26, %c0_27] : memref<1x1xf32, #tpu.memory_space<vmem>>, vector<1x1xf32>
      tpu.vector_store %arg10[%c0_26, %c0_27], %61 {strides = array<i32>} : memref<1x1xf32, #tpu.memory_space<vmem>>, vector<1x1xf32>,
      %c0_28 = arith.constant 0 : index
      %c0_29 = arith.constant 0 : index
      %63 = vector.load %arg6[%c0_28, %c0_29] : memref<8x128xf32, #tpu.memory_space<vmem>>, vector<8x128xf32>
      %64 = arith.addf %63, %47 : vector<8x128xf32>
      %c0_30 = arith.constant 0 : index
      %c0_31 = arith.constant 0 : index
      %65 = vector.load %arg6[%c0_30, %c0_31] : memref<8x128xf32, #tpu.memory_space<vmem>>, vector<8x128xf32>
      tpu.vector_store %arg6[%c0_30, %c0_31], %64 {strides = array<i32>} : memref<8x128xf32, #tpu.memory_space<vmem>>, vector<8x128xf32>,
    } else {
    }
    %c1_i32 = arith.constant 1 : i32
    %54 = arith.cmpi eq, %arg1, %c1_i32 : i32
    %55 = arith.extui %54 : i1 to i32
    %c0_i32_19 = arith.constant 0 : i32
    %56 = arith.cmpi ne, %55, %c0_i32_19 : i32
    scf.if %56 {
      %c0_20 = arith.constant 0 : index
      %c0_21 = arith.constant 0 : index
      %57 = vector.load %arg9[%c0_20, %c0_21] : memref<1x1xf32, #tpu.memory_space<vmem>>, vector<1x1xf32>
      %58 = vector.shape_cast %57 : vector<1x1xf32> to vector<1x1x1xf32>
      %c0_22 = arith.constant 0 : index
      %c0_23 = arith.constant 0 : index
      %c0_24 = arith.constant 0 : index
      %59 = vector.load %arg7[%c0_22, %c0_23, %c0_24] : memref<1x1x1xf32, #tpu.memory_space<vmem>>, vector<1x1x1xf32>
      tpu.vector_store %arg7[%c0_22, %c0_23, %c0_24], %58 {strides = array<i32>} : memref<1x1x1xf32, #tpu.memory_space<vmem>>, vector<1x1x1xf32>,
      %c0_25 = arith.constant 0 : index
      %c0_26 = arith.constant 0 : index
      %60 = vector.load %arg10[%c0_25, %c0_26] : memref<1x1xf32, #tpu.memory_space<vmem>>, vector<1x1xf32>
      %61 = vector.shape_cast %60 : vector<1x1xf32> to vector<1x1x1xf32>
      %c0_27 = arith.constant 0 : index
      %c0_28 = arith.constant 0 : index
      %c0_29 = arith.constant 0 : index
      %62 = vector.load %arg8[%c0_27, %c0_28, %c0_29] : memref<1x1x1xf32, #tpu.memory_space<vmem>>, vector<1x1x1xf32>
      tpu.vector_store %arg8[%c0_27, %c0_28, %c0_29], %61 {strides = array<i32>} : memref<1x1x1xf32, #tpu.memory_space<vmem>>, vector<1x1x1xf32>,
    } else {
    }
    return
  }
  func.func @transform_0(%arg0: i32, %arg1: i32) -> (i32, i32) {
    %c0_i32 = arith.constant 0 : i32
    %c0_i32_0 = arith.constant 0 : i32
    %c0_i32_1 = arith.constant 0 : i32
    return %c0_i32, %c0_i32_0 : i32, i32
  }
  func.func @transform_1(%arg0: i32, %arg1: i32) -> (i32, i32) {
    %c0_i32 = arith.constant 0 : i32
    return %arg1, %arg0 : i32, i32
  }
  func.func @transform_2(%arg0: i32, %arg1: i32) -> (i32, i32) {
    %c0_i32 = arith.constant 0 : i32
    return %arg1, %arg0 : i32, i32
  }
  func.func @transform_3(%arg0: i32, %arg1: i32) -> (i32, i32) {
    %c0_i32 = arith.constant 0 : i32
    return %arg1, %arg0 : i32, i32
  }
  func.func @transform_4(%arg0: i32, %arg1: i32) -> (i32, i32) {
    %c0_i32 = arith.constant 0 : i32
    %c0_i32_0 = arith.constant 0 : i32
    return %c0_i32, %arg0 : i32, i32
  }
  func.func @transform_5(%arg0: i32, %arg1: i32) -> (i32, i32, i32) {
    %c0_i32 = arith.constant 0 : i32
    %c0_i32_0 = arith.constant 0 : i32
    %c0_i32_1 = arith.constant 0 : i32
    return %arg0, %c0_i32, %c0_i32_0 : i32, i32, i32
  }
  func.func @transform_6(%arg0: i32, %arg1: i32) -> (i32, i32, i32) {
    %c0_i32 = arith.constant 0 : i32
    %c0_i32_0 = arith.constant 0 : i32
    %c0_i32_1 = arith.constant 0 : i32
    return %arg0, %c0_i32, %c0_i32_0 : i32, i32, i32
  }
}

</mosaic_0001>

<llo_original>
// kernel: bayes_mlp_forward.6
$region0: #{bayes_mlp_forward.6}
  #allocation0 [shape = 'u32[]', space=smem, size = 0x4, offset = 0x4, fixed_abs, tag = 'smem constant byte address 0x4 - core index']
  #allocation1 [shape = 'u32[144,128]{1,0:T(1,128)}', space=vmem, size = 0x12000, scoped, tag = 'internal scratch']
  #allocation2 [shape = 'f32[1,1]{1,0:T(1,128)}', space=vmem, size = 0x200, scoped, tag = 'scratch operand']
  #allocation3 [shape = 'f32[1,1]{1,0:T(1,128)}', space=vmem, size = 0x200, scoped, tag = 'scratch operand']
  %s0 = inlined_call_operand.vmem [shape: f32[8,256], index: 0, kind: input, shape index: {}]
  %s1 = inlined_call_operand.vmem [shape: f32[256,256], index: 1, kind: input, shape index: {}]
  %s2 = inlined_call_operand.vmem [shape: f32[256,256], index: 2, kind: input, shape index: {}]
  %s3 = inlined_call_operand.vmem [shape: bf16[256,256], index: 3, kind: input, shape index: {}]
  %s4 = inlined_call_operand.vmem [shape: f32[8,256], index: 4, kind: output, shape index: {0}]
  %s5 = inlined_call_operand.vmem [shape: f32[2,1,1], index: 5, kind: output, shape index: {1}]
  %s6 = inlined_call_operand.vmem [shape: f32[2,1,1], index: 6, kind: output, shape index: {2}]
  %7 = xla_tuple %s4, %s5, %s6
  %s8 = sld [smem:[#allocation0]]
  $region194: #{bayes_mlp_forward.6} parent=0
    _
  %s10 = ssub.s32 1, %s8
  %s11 = scalar_select 0, %s10, %s8
  $region1: #{bayes_mlp_forward.6} parent=0
    #allocation4 [shape = 'u8[131072]{0}', space=vmem, size = 0x20000, scoped, tag = 'input window, operand 1']
    #allocation5 [shape = 'u8[131072]{0}', space=vmem, size = 0x20000, scoped, tag = 'input window, operand 2']
    #allocation6 [shape = 'u8[65536]{0}', space=vmem, size = 0x10000, scoped, tag = 'input window, operand 3']
    loop: start=0, step=1, limit=6
    $region2: #{bayes_mlp_forward.6} parent=1 // loop_pre_header
      _
    $region3: #{bayes_mlp_forward.6} parent=1 // loop_header
      %s13 = sphi 0, %s17
      %p14 = scmp.ge.s32.totalorder %s13, 6
      %s20 = sphi 0, %s32
      %s21 = sphi 0, %s28
      %s22 = sphi 0, %s20
      %s23 = sphi 0, %s21
      %s24 = sphi 0, %s22
      %s25 = sphi 0, %s23
      %s33 = sphi 0, %s33
      %s35 = sphi 0, %s33
      %s36 = sphi 0, %s35
      %s50 = sphi 0, %s36
      %s58 = sphi 0, %s60
      %s61 = sphi 0, %s58
      %s62 = sphi 0, %s61
      %s78 = sphi 0, %s62
      %s86 = sphi 0, %s88
      %s89 = sphi 0, %s86
      %s90 = sphi 0, %s89
      %s106 = sphi 0, %s90
      %s114 = sphi 0, %s116
      %s117 = sphi 0, %s114
      %s118 = sphi 0, %s117
      %s134 = sphi 0, %s118
      %s140 = sphi 0, %s142
      %s143 = sphi 0, %s140
      %s144 = sphi 0, %s143
      %s160 = sphi 0, %s144
      %s166 = sphi 0, %s168
      %s169 = sphi 0, %s166
      %s170 = sphi 0, %s169
      %s186 = sphi 0, %s170
      %s192 = sphi 0, %s194
      %s195 = sphi 0, %s192
      %s196 = sphi 0, %s195
      %s212 = sphi 0, %s196
    $region4: #{bayes_mlp_forward.6} parent=1 // loop_header_branch
      %16 = sbr.rel (%p14) target = $region8
    $region5: #{bayes_mlp_forward.6} parent=1 // loop_body
      %s18 = ssub.s32 %s13, 1
      %s19 = ssub.s32 %s13, 2
      %s26 = sadd.s32 1, %s21
      %p27 = scmp.ge.s32.totalorder %s26, 2
      %s28 = scalar_select %p27, 0, %s26
      %s29 = sadd.s32 1, %s20
      %s30 = scalar_select %p27, %s29, %s20
      %p31 = scmp.ge.s32.totalorder %s30, 2
      %s32 = scalar_select %p31, 0, %s30
      %s34 = sadd.s32 %s33, 1
      %p37 = scmp.eq.s32.totalorder %s13, 3
      %p38 = scmp.ne.s32.totalorder %s33, %s35
      %p39 = scmp.eq.s32.totalorder %s13, 0
      %p40 = por %p38, %p39
      %p41 = scmp.ne.s32.totalorder %s33, %s35
      %p42 = scmp.eq.s32.totalorder %s18, 3
      %p43 = por %p41, %p42
      %p44 = scmp.ne.s32.totalorder %s35, %s36
      %p45 = scmp.eq.s32.totalorder %s18, 0
      %p46 = por %p44, %p45
      %p47 = scmp.ne.s32.totalorder %s35, %s36
      %p48 = scmp.eq.s32.totalorder %s19, 3
      %p49 = por %p47, %p48
      %p51 = scmp.ne.s32.totalorder %s36, %s50
      %p52 = scmp.eq.s32.totalorder %s19, 0
      %p53 = por %p51, %p52
      %s54 = ssub.s32 %s21, %s28
      %s55 = ssub.s32 %s20, %s32
      %s56 = sor.u32 %s54, %s55
      %p57 = scmp.eq.s32.totalorder %s56, 0
      %s59 = sadd.s32 %s58, 1
      %s60 = scalar_select %p57, %s58, %s59
      %p63 = pneg %p57
      %p64 = scmp.eq.s32.totalorder %s13, 3
      %p65 = por %p63, %p64
      %p66 = scmp.ne.s32.totalorder %s58, %s61
      %p67 = scmp.eq.s32.totalorder %s13, 0
      %p68 = por %p66, %p67
      %p69 = scmp.ne.s32.totalorder %s58, %s61
      %p70 = scmp.eq.s32.totalorder %s18, 3
      %p71 = por %p69, %p70
      %p72 = scmp.ne.s32.totalorder %s61, %s62
      %p73 = scmp.eq.s32.totalorder %s18, 0
      %p74 = por %p72, %p73
      %p75 = scmp.ne.s32.totalorder %s61, %s62
      %p76 = scmp.eq.s32.totalorder %s19, 3
      %p77 = por %p75, %p76
      %p79 = scmp.ne.s32.totalorder %s62, %s78
      %p80 = scmp.eq.s32.totalorder %s19, 0
      %p81 = por %p79, %p80
      %s82 = ssub.s32 %s21, %s28
      %s83 = ssub.s32 %s20, %s32
      %s84 = sor.u32 %s82, %s83
      %p85 = scmp.eq.s32.totalorder %s84, 0
      %s87 = sadd.s32 %s86, 1
      %s88 = scalar_select %p85, %s86, %s87
      %p91 = pneg %p85
      %p92 = scmp.eq.s32.totalorder %s13, 3
      %p93 = por %p91, %p92
      %p94 = scmp.ne.s32.totalorder %s86, %s89
      %p95 = scmp.eq.s32.totalorder %s13, 0
      %p96 = por %p94, %p95
      %p97 = scmp.ne.s32.totalorder %s86, %s89
      %p98 = scmp.eq.s32.totalorder %s18, 3
      %p99 = por %p97, %p98
      %p100 = scmp.ne.s32.totalorder %s89, %s90
      %p101 = scmp.eq.s32.totalorder %s18, 0
      %p102 = por %p100, %p101
      %p103 = scmp.ne.s32.totalorder %s89, %s90
      %p104 = scmp.eq.s32.totalorder %s19, 3
      %p105 = por %p103, %p104
      %p107 = scmp.ne.s32.totalorder %s90, %s106
      %p108 = scmp.eq.s32.totalorder %s19, 0
      %p109 = por %p107, %p108
      %s110 = ssub.s32 %s21, %s28
      %s111 = ssub.s32 %s20, %s32
      %s112 = sor.u32 %s110, %s111
      %p113 = scmp.eq.s32.totalorder %s112, 0
      %s115 = sadd.s32 %s114, 1
      %s116 = scalar_select %p113, %s114, %s115
      %p119 = pneg %p113
      %p120 = scmp.eq.s32.totalorder %s13, 3
      %p121 = por %p119, %p120
      %p122 = scmp.ne.s32.totalorder %s114, %s117
      %p123 = scmp.eq.s32.totalorder %s13, 0
      %p124 = por %p122, %p123
      %p125 = scmp.ne.s32.totalorder %s114, %s117
      %p126 = scmp.eq.s32.totalorder %s18, 3
      %p127 = por %p125, %p126
      %p128 = scmp.ne.s32.totalorder %s117, %s118
      %p129 = scmp.eq.s32.totalorder %s18, 0
      %p130 = por %p128, %p129
      %p131 = scmp.ne.s32.totalorder %s117, %s118
      %p132 = scmp.eq.s32.totalorder %s19, 3
      %p133 = por %p131, %p132
      %p135 = scmp.ne.s32.totalorder %s118, %s134
      %p136 = scmp.eq.s32.totalorder %s19, 0
      %p137 = por %p135, %p136
      %s138 = ssub.s32 %s20, %s32
      %p139 = scmp.eq.s32.totalorder %s138, 0
      %s141 = sadd.s32 %s140, 1
      %s142 = scalar_select %p139, %s140, %s141
      %p145 = pneg %p139
      %p146 = scmp.eq.s32.totalorder %s13, 3
      %p147 = por %p145, %p146
      %p148 = scmp.ne.s32.totalorder %s140, %s143
      %p149 = scmp.eq.s32.totalorder %s13, 0
      %p150 = por %p148, %p149
      %p151 = scmp.ne.s32.totalorder %s140, %s143
      %p152 = scmp.eq.s32.totalorder %s18, 3
      %p153 = por %p151, %p152
      %p154 = scmp.ne.s32.totalorder %s143, %s144
      %p155 = scmp.eq.s32.totalorder %s18, 0
      %p156 = por %p154, %p155
      %p157 = scmp.ne.s32.totalorder %s143, %s144
      %p158 = scmp.eq.s32.totalorder %s19, 3
      %p159 = por %p157, %p158
      %p161 = scmp.ne.s32.totalorder %s144, %s160
      %p162 = scmp.eq.s32.totalorder %s19, 0
      %p163 = por %p161, %p162
      %s164 = ssub.s32 %s20, %s32
      %p165 = scmp.eq.s32.totalorder %s164, 0
      %s167 = sadd.s32 %s166, 1
      %s168 = scalar_select %p165, %s166, %s167
      %p171 = pneg %p165
      %p172 = scmp.eq.s32.totalorder %s13, 3
      %p173 = por %p171, %p172
      %p174 = scmp.ne.s32.totalorder %s166, %s169
      %p175 = scmp.eq.s32.totalorder %s13, 0
      %p176 = por %p174, %p175
      %p177 = scmp.ne.s32.totalorder %s166, %s169
      %p178 = scmp.eq.s32.totalorder %s18, 3
      %p179 = por %p177, %p178
      %p180 = scmp.ne.s32.totalorder %s169, %s170
      %p181 = scmp.eq.s32.totalorder %s18, 0
      %p182 = por %p180, %p181
      %p183 = scmp.ne.s32.totalorder %s169, %s170
      %p184 = scmp.eq.s32.totalorder %s19, 3
      %p185 = por %p183, %p184
      %p187 = scmp.ne.s32.totalorder %s170, %s186
      %p188 = scmp.eq.s32.totalorder %s19, 0
      %p189 = por %p187, %p188
      %s190 = ssub.s32 %s20, %s32
      %p191 = scmp.eq.s32.totalorder %s190, 0
      %s193 = sadd.s32 %s192, 1
      %s194 = scalar_select %p191, %s192, %s193
      %p197 = pneg %p191
      %p198 = scmp.eq.s32.totalorder %s13, 3
      %p199 = por %p197, %p198
      %p200 = scmp.ne.s32.totalorder %s192, %s195
      %p201 = scmp.eq.s32.totalorder %s13, 0
      %p202 = por %p200, %p201
      %p203 = scmp.ne.s32.totalorder %s192, %s195
      %p204 = scmp.eq.s32.totalorder %s18, 3
      %p205 = por %p203, %p204
      %p206 = scmp.ne.s32.totalorder %s195, %s196
      %p207 = scmp.eq.s32.totalorder %s18, 0
      %p208 = por %p206, %p207
      %p209 = scmp.ne.s32.totalorder %s195, %s196
      %p210 = scmp.eq.s32.totalorder %s19, 3
      %p211 = por %p209, %p210
      %p213 = scmp.ne.s32.totalorder %s196, %s212
      %p214 = scmp.eq.s32.totalorder %s19, 0
      %p215 = por %p213, %p214
      %p216 = scmp.le.s32.totalorder 1, %s13
      %p217 = scmp.lt.s32.totalorder %s13, 5
      %p218 = pnand %p216, %p217
      %p219 = pneg %p218
      // Predicated region
      $region9: #{bayes_mlp_forward.6} parent=5 // pred_check
        _
      $region10: #{bayes_mlp_forward.6} parent=5 // pred_check_branch
        %221 = sbr.rel (%p218) target = $region12
      $region11: #{bayes_mlp_forward.6} parent=5 // pred_region
        %s222 = ssub.s32 %s13, 1
        // Predicated region
        $region13: #{bayes_mlp_forward.6} parent=11 // pred_check
          %p223 = pneg %p46
        $region14: #{bayes_mlp_forward.6} parent=11 // pred_check_branch
          %225 = sbr.rel (%p223) target = $region16
        $region15: #{bayes_mlp_forward.6} parent=11 // pred_region
          _
        $region16: #{bayes_mlp_forward.6} parent=11 // pred_fallthru
          _
      $region12: #{bayes_mlp_forward.6} parent=5 // pred_fallthru
        _
      %p226 = scmp.lt.s32.totalorder %s13, 4
      // Predicated region
      $region17: #{bayes_mlp_forward.6} parent=5 // pred_check
        %p227 = pneg %p226
      $region18: #{bayes_mlp_forward.6} parent=5 // pred_check_branch
        %229 = sbr.rel (%p227) target = $region20
      $region19: #{bayes_mlp_forward.6} parent=5 // pred_region
        // Predicated region
        $region21: #{bayes_mlp_forward.6} parent=19 // pred_check
          %p230 = pneg %p68
        $region22: #{bayes_mlp_forward.6} parent=19 // pred_check_branch
          %232 = sbr.rel (%p230) target = $region24
        $region23: #{bayes_mlp_forward.6} parent=19 // pred_region
          %s233 = sand.u32 %s58, 1
          %s234 = sand.u32 %s58, 1
          %s235 = smul.addr %s234, 128
          %s236 = scalar_lea.vmem [#allocation4], %s235
          %s237 = smul.u32 16, %s21
          %s238 = smul.addr %s237, 2
          %s239 = sadd.s32 %s20, %s238
          %s240 = smul.addr %s239, 8
          %s241 = scalar_lea.vmem %s1, %s240
          // Predicated region
          $region25: #{bayes_mlp_forward.6} parent=23 // pred_check
            _
          $region26: #{bayes_mlp_forward.6} parent=23 // pred_check_branch
            %243 = sbr.rel (0) target = $region28
          $region27: #{bayes_mlp_forward.6} parent=23 // pred_region
            // Predicated region
            $region29: #{bayes_mlp_forward.6} parent=27 // pred_check
              _
            $region30: #{bayes_mlp_forward.6} parent=27 // pred_check_branch
              %245 = sbr.rel (0) target = $region32
            $region31: #{bayes_mlp_forward.6} parent=27 // pred_region
              // Predicated region
              $region44: #{bayes_mlp_forward.6} parent=31 // pred_check
                _
              $region45: #{bayes_mlp_forward.6} parent=31 // pred_check_branch
                %290 = sbr.rel (0) target = $region47
              $region46: #{bayes_mlp_forward.6} parent=31 // pred_region
                loop: start=0, step=1, limit=1
                $region48: #{bayes_mlp_forward.6} parent=46 // loop_pre_header
                  _
                $region49: #{bayes_mlp_forward.6} parent=46 // loop_header
                  %s292 = sphi 0, %s296
                  %p293 = scmp.ge.s32.totalorder %s292, 1
                  %s297 = sphi %s241, %s241
                  %s298 = sphi %s236, %s236
                $region50: #{bayes_mlp_forward.6} parent=46 // loop_header_branch
                  %295 = sbr.rel (%p293) target = $region54
                $region51: #{bayes_mlp_forward.6} parent=46 // loop_body
                  %v299 = vld [vmem:[%s297] sm:$0xff]
                  %300 = vst [vmem:[%s298] sm:$0xff] %v299
                  %v301 = vld [vmem:[%s297 + $0x10] sm:$0xff]
                  %302 = vst [vmem:[%s298 + $0x8] sm:$0xff] %v301
                  %v303 = vld [vmem:[%s297 + $0x20] sm:$0xff]
                  %304 = vst [vmem:[%s298 + $0x10] sm:$0xff] %v303
                  %v305 = vld [vmem:[%s297 + $0x30] sm:$0xff]
                  %306 = vst [vmem:[%s298 + $0x18] sm:$0xff] %v305
                  %v307 = vld [vmem:[%s297 + $0x40] sm:$0xff]
                  %308 = vst [vmem:[%s298 + $0x20] sm:$0xff] %v307
                  %v309 = vld [vmem:[%s297 + $0x50] sm:$0xff]
                  %310 = vst [vmem:[%s298 + $0x28] sm:$0xff] %v309
                  %v311 = vld [vmem:[%s297 + $0x60] sm:$0xff]
                  %312 = vst [vmem:[%s298 + $0x30] sm:$0xff] %v311
                  %v313 = vld [vmem:[%s297 + $0x70] sm:$0xff]
                  %314 = vst [vmem:[%s298 + $0x38] sm:$0xff] %v313
                  %v315 = vld [vmem:[%s297 + $0x80] sm:$0xff]
                  %316 = vst [vmem:[%s298 + $0x40] sm:$0xff] %v315
                  %v317 = vld [vmem:[%s297 + $0x90] sm:$0xff]
                  %318 = vst [vmem:[%s298 + $0x48] sm:$0xff] %v317
                  %v319 = vld [vmem:[%s297 + $0xa0] sm:$0xff]
                  %320 = vst [vmem:[%s298 + $0x50] sm:$0xff] %v319
                  %v321 = vld [vmem:[%s297 + $0xb0] sm:$0xff]
                  %322 = vst [vmem:[%s298 + $0x58] sm:$0xff] %v321
                  %v323 = vld [vmem:[%s297 + $0xc0] sm:$0xff]
                  %324 = vst [vmem:[%s298 + $0x60] sm:$0xff] %v323
                  %v325 = vld [vmem:[%s297 + $0xd0] sm:$0xff]
                  %326 = vst [vmem:[%s298 + $0x68] sm:$0xff] %v325
                  %v327 = vld [vmem:[%s297 + $0xe0] sm:$0xff]
                  %328 = vst [vmem:[%s298 + $0x70] sm:$0xff] %v327
                  %v329 = vld [vmem:[%s297 + $0xf0] sm:$0xff]
                  %330 = vst [vmem:[%s298 + $0x78] sm:$0xff] %v329
                $region52: #{bayes_mlp_forward.6} parent=46 // loop_footer
                  %s296 = sadd.s32 1, %s292
                $region53: #{bayes_mlp_forward.6} parent=46 // loop_footer_branch
                  %291 = sbr.rel target = $region49
                $region54: #{bayes_mlp_forward.6} parent=46 // loop_exit
                  _
              $region47: #{bayes_mlp_forward.6} parent=31 // pred_fallthru
                _
              // Predicated region
              $region55: #{bayes_mlp_forward.6} parent=31 // pred_check
                _
              $region56: #{bayes_mlp_forward.6} parent=31 // pred_check_branch
                %332 = sbr.rel target = $region58
              $region57: #{bayes_mlp_forward.6} parent=31 // pred_region
                _
              $region58: #{bayes_mlp_forward.6} parent=31 // pred_fallthru
                _
            $region32: #{bayes_mlp_forward.6} parent=27 // pred_fallthru
              _
            // Predicated region
            $region33: #{bayes_mlp_forward.6} parent=27 // pred_check
              _
            $region34: #{bayes_mlp_forward.6} parent=27 // pred_check_branch
              %247 = sbr.rel target = $region36
            $region35: #{bayes_mlp_forward.6} parent=27 // pred_region
              loop: start=0, step=1, limit=1
              $region37: #{bayes_mlp_forward.6} parent=35 // loop_pre_header
                _
              $region38: #{bayes_mlp_forward.6} parent=35 // loop_header
                %s250 = sphi 0, %s254
                %p251 = scmp.ge.s32.totalorder %s250, 1
                %s255 = sphi %s241, %s241
                %s256 = sphi %s236, %s236
              $region39: #{bayes_mlp_forward.6} parent=35 // loop_header_branch
                %253 = sbr.rel (%p251) target = $region43
              $region40: #{bayes_mlp_forward.6} parent=35 // loop_body
                %v257 = vld [vmem:[%s255] sm:$0xff]
                %258 = vst [vmem:[%s256] sm:$0xff] %v257
                %v259 = vld [vmem:[%s255 + $0x10] sm:$0xff]
                %260 = vst [vmem:[%s256 + $0x8] sm:$0xff] %v259
                %v261 = vld [vmem:[%s255 + $0x20] sm:$0xff]
                %262 = vst [vmem:[%s256 + $0x10] sm:$0xff] %v261
                %v263 = vld [vmem:[%s255 + $0x30] sm:$0xff]
                %264 = vst [vmem:[%s256 + $0x18] sm:$0xff] %v263
                %v265 = vld [vmem:[%s255 + $0x40] sm:$0xff]
                %266 = vst [vmem:[%s256 + $0x20] sm:$0xff] %v265
                %v267 = vld [vmem:[%s255 + $0x50] sm:$0xff]
                %268 = vst [vmem:[%s256 + $0x28] sm:$0xff] %v267
                %v269 = vld [vmem:[%s255 + $0x60] sm:$0xff]
                %270 = vst [vmem:[%s256 + $0x30] sm:$0xff] %v269
                %v271 = vld [vmem:[%s255 + $0x70] sm:$0xff]
                %272 = vst [vmem:[%s256 + $0x38] sm:$0xff] %v271
                %v273 = vld [vmem:[%s255 + $0x80] sm:$0xff]
                %274 = vst [vmem:[%s256 + $0x40] sm:$0xff] %v273
                %v275 = vld [vmem:[%s255 + $0x90] sm:$0xff]
                %276 = vst [vmem:[%s256 + $0x48] sm:$0xff] %v275
                %v277 = vld [vmem:[%s255 + $0xa0] sm:$0xff]
                %278 = vst [vmem:[%s256 + $0x50] sm:$0xff] %v277
                %v279 = vld [vmem:[%s255 + $0xb0] sm:$0xff]
                %280 = vst [vmem:[%s256 + $0x58] sm:$0xff] %v279
                %v281 = vld [vmem:[%s255 + $0xc0] sm:$0xff]
                %282 = vst [vmem:[%s256 + $0x60] sm:$0xff] %v281
                %v283 = vld [vmem:[%s255 + $0xd0] sm:$0xff]
                %284 = vst [vmem:[%s256 + $0x68] sm:$0xff] %v283
                %v285 = vld [vmem:[%s255 + $0xe0] sm:$0xff]
                %286 = vst [vmem:[%s256 + $0x70] sm:$0xff] %v285
                %v287 = vld [vmem:[%s255 + $0xf0] sm:$0xff]
                %288 = vst [vmem:[%s256 + $0x78] sm:$0xff] %v287
              $region41: #{bayes_mlp_forward.6} parent=35 // loop_footer
                %s254 = sadd.s32 1, %s250
              $region42: #{bayes_mlp_forward.6} parent=35 // loop_footer_branch
                %249 = sbr.rel target = $region38
              $region43: #{bayes_mlp_forward.6} parent=35 // loop_exit
                _
            $region36: #{bayes_mlp_forward.6} parent=27 // pred_fallthru
              _
          $region28: #{bayes_mlp_forward.6} parent=23 // pred_fallthru
            _
          %333 = vnop
        $region24: #{bayes_mlp_forward.6} parent=19 // pred_fallthru
          _
        // Predicated region
        $region59: #{bayes_mlp_forward.6} parent=19 // pred_check
          %p334 = pneg %p96
        $region60: #{bayes_mlp_forward.6} parent=19 // pred_check_branch
          %336 = sbr.rel (%p334) target = $region62
        $region61: #{bayes_mlp_forward.6} parent=19 // pred_region
          %s337 = sand.u32 %s86, 1
          %s338 = sand.u32 %s86, 1
          %s339 = smul.addr %s338, 128
          %s340 = scalar_lea.vmem [#allocation5], %s339
          %s341 = smul.u32 16, %s21
          %s342 = smul.addr %s341, 2
          %s343 = sadd.s32 %s20, %s342
          %s344 = smul.addr %s343, 8
          %s345 = scalar_lea.vmem %s2, %s344
          // Predicated region
          $region63: #{bayes_mlp_forward.6} parent=61 // pred_check
            _
          $region64: #{bayes_mlp_forward.6} parent=61 // pred_check_branch
            %347 = sbr.rel (0) target = $region66
          $region65: #{bayes_mlp_forward.6} parent=61 // pred_region
            // Predicated region
            $region67: #{bayes_mlp_forward.6} parent=65 // pred_check
              _
            $region68: #{bayes_mlp_forward.6} parent=65 // pred_check_branch
              %349 = sbr.rel (0) target = $region70
            $region69: #{bayes_mlp_forward.6} parent=65 // pred_region
              // Predicated region
              $region82: #{bayes_mlp_forward.6} parent=69 // pred_check
                _
              $region83: #{bayes_mlp_forward.6} parent=69 // pred_check_branch
                %394 = sbr.rel (0) target = $region85
              $region84: #{bayes_mlp_forward.6} parent=69 // pred_region
                loop: start=0, step=1, limit=1
                $region86: #{bayes_mlp_forward.6} parent=84 // loop_pre_header
                  _
                $region87: #{bayes_mlp_forward.6} parent=84 // loop_header
                  %s396 = sphi 0, %s400
                  %p397 = scmp.ge.s32.totalorder %s396, 1
                  %s401 = sphi %s345, %s345
                  %s402 = sphi %s340, %s340
                $region88: #{bayes_mlp_forward.6} parent=84 // loop_header_branch
                  %399 = sbr.rel (%p397) target = $region92
                $region89: #{bayes_mlp_forward.6} parent=84 // loop_body
                  %v403 = vld [vmem:[%s401] sm:$0xff]
                  %404 = vst [vmem:[%s402] sm:$0xff] %v403
                  %v405 = vld [vmem:[%s401 + $0x10] sm:$0xff]
                  %406 = vst [vmem:[%s402 + $0x8] sm:$0xff] %v405
                  %v407 = vld [vmem:[%s401 + $0x20] sm:$0xff]
                  %408 = vst [vmem:[%s402 + $0x10] sm:$0xff] %v407
                  %v409 = vld [vmem:[%s401 + $0x30] sm:$0xff]
                  %410 = vst [vmem:[%s402 + $0x18] sm:$0xff] %v409
                  %v411 = vld [vmem:[%s401 + $0x40] sm:$0xff]
                  %412 = vst [vmem:[%s402 + $0x20] sm:$0xff] %v411
                  %v413 = vld [vmem:[%s401 + $0x50] sm:$0xff]
                  %414 = vst [vmem:[%s402 + $0x28] sm:$0xff] %v413
                  %v415 = vld [vmem:[%s401 + $0x60] sm:$0xff]
                  %416 = vst [vmem:[%s402 + $0x30] sm:$0xff] %v415
                  %v417 = vld [vmem:[%s401 + $0x70] sm:$0xff]
                  %418 = vst [vmem:[%s402 + $0x38] sm:$0xff] %v417
                  %v419 = vld [vmem:[%s401 + $0x80] sm:$0xff]
                  %420 = vst [vmem:[%s402 + $0x40] sm:$0xff] %v419
                  %v421 = vld [vmem:[%s401 + $0x90] sm:$0xff]
                  %422 = vst [vmem:[%s402 + $0x48] sm:$0xff] %v421
                  %v423 = vld [vmem:[%s401 + $0xa0] sm:$0xff]
                  %424 = vst [vmem:[%s402 + $0x50] sm:$0xff] %v423
                  %v425 = vld [vmem:[%s401 + $0xb0] sm:$0xff]
                  %426 = vst [vmem:[%s402 + $0x58] sm:$0xff] %v425
                  %v427 = vld [vmem:[%s401 + $0xc0] sm:$0xff]
                  %428 = vst [vmem:[%s402 + $0x60] sm:$0xff] %v427
                  %v429 = vld [vmem:[%s401 + $0xd0] sm:$0xff]
                  %430 = vst [vmem:[%s402 + $0x68] sm:$0xff] %v429
                  %v431 = vld [vmem:[%s401 + $0xe0] sm:$0xff]
                  %432 = vst [vmem:[%s402 + $0x70] sm:$0xff] %v431
                  %v433 = vld [vmem:[%s401 + $0xf0] sm:$0xff]
                  %434 = vst [vmem:[%s402 + $0x78] sm:$0xff] %v433
                $region90: #{bayes_mlp_forward.6} parent=84 // loop_footer
                  %s400 = sadd.s32 1, %s396
                $region91: #{bayes_mlp_forward.6} parent=84 // loop_footer_branch
                  %395 = sbr.rel target = $region87
                $region92: #{bayes_mlp_forward.6} parent=84 // loop_exit
                  _
              $region85: #{bayes_mlp_forward.6} parent=69 // pred_fallthru
                _
              // Predicated region
              $region93: #{bayes_mlp_forward.6} parent=69 // pred_check
                _
              $region94: #{bayes_mlp_forward.6} parent=69 // pred_check_branch
                %436 = sbr.rel target = $region96
              $region95: #{bayes_mlp_forward.6} parent=69 // pred_region
                _
              $region96: #{bayes_mlp_forward.6} parent=69 // pred_fallthru
                _
            $region70: #{bayes_mlp_forward.6} parent=65 // pred_fallthru
              _
            // Predicated region
            $region71: #{bayes_mlp_forward.6} parent=65 // pred_check
              _
            $region72: #{bayes_mlp_forward.6} parent=65 // pred_check_branch
              %351 = sbr.rel target = $region74
            $region73: #{bayes_mlp_forward.6} parent=65 // pred_region
              loop: start=0, step=1, limit=1
              $region75: #{bayes_mlp_forward.6} parent=73 // loop_pre_header
                _
              $region76: #{bayes_mlp_forward.6} parent=73 // loop_header
                %s354 = sphi 0, %s358
                %p355 = scmp.ge.s32.totalorder %s354, 1
                %s359 = sphi %s345, %s345
                %s360 = sphi %s340, %s340
              $region77: #{bayes_mlp_forward.6} parent=73 // loop_header_branch
                %357 = sbr.rel (%p355) target = $region81
              $region78: #{bayes_mlp_forward.6} parent=73 // loop_body
                %v361 = vld [vmem:[%s359] sm:$0xff]
                %362 = vst [vmem:[%s360] sm:$0xff] %v361
                %v363 = vld [vmem:[%s359 + $0x10] sm:$0xff]
                %364 = vst [vmem:[%s360 + $0x8] sm:$0xff] %v363
                %v365 = vld [vmem:[%s359 + $0x20] sm:$0xff]
                %366 = vst [vmem:[%s360 + $0x10] sm:$0xff] %v365
                %v367 = vld [vmem:[%s359 + $0x30] sm:$0xff]
                %368 = vst [vmem:[%s360 + $0x18] sm:$0xff] %v367
                %v369 = vld [vmem:[%s359 + $0x40] sm:$0xff]
                %370 = vst [vmem:[%s360 + $0x20] sm:$0xff] %v369
                %v371 = vld [vmem:[%s359 + $0x50] sm:$0xff]
                %372 = vst [vmem:[%s360 + $0x28] sm:$0xff] %v371
                %v373 = vld [vmem:[%s359 + $0x60] sm:$0xff]
                %374 = vst [vmem:[%s360 + $0x30] sm:$0xff] %v373
                %v375 = vld [vmem:[%s359 + $0x70] sm:$0xff]
                %376 = vst [vmem:[%s360 + $0x38] sm:$0xff] %v375
                %v377 = vld [vmem:[%s359 + $0x80] sm:$0xff]
                %378 = vst [vmem:[%s360 + $0x40] sm:$0xff] %v377
                %v379 = vld [vmem:[%s359 + $0x90] sm:$0xff]
                %380 = vst [vmem:[%s360 + $0x48] sm:$0xff] %v379
                %v381 = vld [vmem:[%s359 + $0xa0] sm:$0xff]
                %382 = vst [vmem:[%s360 + $0x50] sm:$0xff] %v381
                %v383 = vld [vmem:[%s359 + $0xb0] sm:$0xff]
                %384 = vst [vmem:[%s360 + $0x58] sm:$0xff] %v383
                %v385 = vld [vmem:[%s359 + $0xc0] sm:$0xff]
                %386 = vst [vmem:[%s360 + $0x60] sm:$0xff] %v385
                %v387 = vld [vmem:[%s359 + $0xd0] sm:$0xff]
                %388 = vst [vmem:[%s360 + $0x68] sm:$0xff] %v387
                %v389 = vld [vmem:[%s359 + $0xe0] sm:$0xff]
                %390 = vst [vmem:[%s360 + $0x70] sm:$0xff] %v389
                %v391 = vld [vmem:[%s359 + $0xf0] sm:$0xff]
                %392 = vst [vmem:[%s360 + $0x78] sm:$0xff] %v391
              $region79: #{bayes_mlp_forward.6} parent=73 // loop_footer
                %s358 = sadd.s32 1, %s354
              $region80: #{bayes_mlp_forward.6} parent=73 // loop_footer_branch
                %353 = sbr.rel target = $region76
              $region81: #{bayes_mlp_forward.6} parent=73 // loop_exit
                _
            $region74: #{bayes_mlp_forward.6} parent=65 // pred_fallthru
              _
          $region66: #{bayes_mlp_forward.6} parent=61 // pred_fallthru
            _
          %437 = vnop
        $region62: #{bayes_mlp_forward.6} parent=19 // pred_fallthru
          _
        // Predicated region
        $region97: #{bayes_mlp_forward.6} parent=19 // pred_check
          %p438 = pneg %p124
        $region98: #{bayes_mlp_forward.6} parent=19 // pred_check_branch
          %440 = sbr.rel (%p438) target = $region100
        $region99: #{bayes_mlp_forward.6} parent=19 // pred_region
          %s441 = sand.u32 %s114, 1
          %s442 = sand.u32 %s114, 1
          %s443 = smul.addr %s442, 64
          %s444 = scalar_lea.vmem [#allocation6], %s443
          %s445 = smul.u32 16, %s21
          %s446 = smul.addr %s445, 2
          %s447 = sadd.s32 %s20, %s446
          %s448 = smul.addr %s447, 4
          %s449 = scalar_lea.vmem %s3, %s448
          // Predicated region
          $region101: #{bayes_mlp_forward.6} parent=99 // pred_check
            _
          $region102: #{bayes_mlp_forward.6} parent=99 // pred_check_branch
            %451 = sbr.rel (0) target = $region104
          $region103: #{bayes_mlp_forward.6} parent=99 // pred_region
            // Predicated region
            $region105: #{bayes_mlp_forward.6} parent=103 // pred_check
              _
            $region106: #{bayes_mlp_forward.6} parent=103 // pred_check_branch
              %453 = sbr.rel target = $region108
            $region107: #{bayes_mlp_forward.6} parent=103 // pred_region
              // Predicated region
              $region120: #{bayes_mlp_forward.6} parent=107 // pred_check
                _
              $region121: #{bayes_mlp_forward.6} parent=107 // pred_check_branch
                %498 = sbr.rel (0) target = $region123
              $region122: #{bayes_mlp_forward.6} parent=107 // pred_region
                loop: start=0, step=1, limit=1
                $region124: #{bayes_mlp_forward.6} parent=122 // loop_pre_header
                  _
                $region125: #{bayes_mlp_forward.6} parent=122 // loop_header
                  %s500 = sphi 0, %s504
                  %p501 = scmp.ge.s32.totalorder %s500, 1
                  %s505 = sphi %s449, %s449
                  %s506 = sphi %s444, %s444
                $region126: #{bayes_mlp_forward.6} parent=122 // loop_header_branch
                  %503 = sbr.rel (%p501) target = $region130
                $region127: #{bayes_mlp_forward.6} parent=122 // loop_body
                  _
                $region128: #{bayes_mlp_forward.6} parent=122 // loop_footer
                  %s504 = sadd.s32 1, %s500
                $region129: #{bayes_mlp_forward.6} parent=122 // loop_footer_branch
                  %499 = sbr.rel target = $region125
                $region130: #{bayes_mlp_forward.6} parent=122 // loop_exit
                  _
                loop: start=0, step=1, limit=1
                $region131: #{bayes_mlp_forward.6} parent=122 // loop_pre_header
                  _
                $region132: #{bayes_mlp_forward.6} parent=122 // loop_header
                  %s509 = sphi 0, %s513
                  %p510 = scmp.ge.s32.totalorder %s509, 1
                  %s514 = sphi %s449, %s449
                  %s515 = sphi %s444, %s444
                $region133: #{bayes_mlp_forward.6} parent=122 // loop_header_branch
                  %512 = sbr.rel (%p510) target = $region137
                $region134: #{bayes_mlp_forward.6} parent=122 // loop_body
                  %v516 = vld [vmem:[%s514] sm:$0xf]
                  %517 = vst [vmem:[%s515] sm:$0xf] %v516
                  %v518 = vld [vmem:[%s514 + $0x8] sm:$0xf]
                  %519 = vst [vmem:[%s515 + $0x4] sm:$0xf] %v518
                  %v520 = vld [vmem:[%s514 + $0x10] sm:$0xf]
                  %521 = vst [vmem:[%s515 + $0x8] sm:$0xf] %v520
                  %v522 = vld [vmem:[%s514 + $0x18] sm:$0xf]
                  %523 = vst [vmem:[%s515 + $0xc] sm:$0xf] %v522
                  %v524 = vld [vmem:[%s514 + $0x20] sm:$0xf]
                  %525 = vst [vmem:[%s515 + $0x10] sm:$0xf] %v524
                  %v526 = vld [vmem:[%s514 + $0x28] sm:$0xf]
                  %527 = vst [vmem:[%s515 + $0x14] sm:$0xf] %v526
                  %v528 = vld [vmem:[%s514 + $0x30] sm:$0xf]
                  %529 = vst [vmem:[%s515 + $0x18] sm:$0xf] %v528
                  %v530 = vld [vmem:[%s514 + $0x38] sm:$0xf]
                  %531 = vst [vmem:[%s515 + $0x1c] sm:$0xf] %v530
                  %v532 = vld [vmem:[%s514 + $0x40] sm:$0xf]
                  %533 = vst [vmem:[%s515 + $0x20] sm:$0xf] %v532
                  %v534 = vld [vmem:[%s514 + $0x48] sm:$0xf]
                  %535 = vst [vmem:[%s515 + $0x24] sm:$0xf] %v534
                  %v536 = vld [vmem:[%s514 + $0x50] sm:$0xf]
                  %537 = vst [vmem:[%s515 + $0x28] sm:$0xf] %v536
                  %v538 = vld [vmem:[%s514 + $0x58] sm:$0xf]
                  %539 = vst [vmem:[%s515 + $0x2c] sm:$0xf] %v538
                  %v540 = vld [vmem:[%s514 + $0x60] sm:$0xf]
                  %541 = vst [vmem:[%s515 + $0x30] sm:$0xf] %v540
                  %v542 = vld [vmem:[%s514 + $0x68] sm:$0xf]
                  %543 = vst [vmem:[%s515 + $0x34] sm:$0xf] %v542
                  %v544 = vld [vmem:[%s514 + $0x70] sm:$0xf]
                  %545 = vst [vmem:[%s515 + $0x38] sm:$0xf] %v544
                  %v546 = vld [vmem:[%s514 + $0x78] sm:$0xf]
                  %547 = vst [vmem:[%s515 + $0x3c] sm:$0xf] %v546
                $region135: #{bayes_mlp_forward.6} parent=122 // loop_footer
                  %s513 = sadd.s32 1, %s509
                $region136: #{bayes_mlp_forward.6} parent=122 // loop_footer_branch
                  %508 = sbr.rel target = $region132
                $region137: #{bayes_mlp_forward.6} parent=122 // loop_exit
                  _
              $region123: #{bayes_mlp_forward.6} parent=107 // pred_fallthru
                _
            $region108: #{bayes_mlp_forward.6} parent=103 // pred_fallthru
              _
            // Predicated region
            $region109: #{bayes_mlp_forward.6} parent=103 // pred_check
              _
            $region110: #{bayes_mlp_forward.6} parent=103 // pred_check_branch
              %455 = sbr.rel (0) target = $region112
            $region111: #{bayes_mlp_forward.6} parent=103 // pred_region
              loop: start=0, step=1, limit=1
              $region113: #{bayes_mlp_forward.6} parent=111 // loop_pre_header
                _
              $region114: #{bayes_mlp_forward.6} parent=111 // loop_header
                %s458 = sphi 0, %s462
                %p459 = scmp.ge.s32.totalorder %s458, 1
                %s463 = sphi %s449, %s449
                %s464 = sphi %s444, %s444
              $region115: #{bayes_mlp_forward.6} parent=111 // loop_header_branch
                %461 = sbr.rel (%p459) target = $region119
              $region116: #{bayes_mlp_forward.6} parent=111 // loop_body
                %v465 = vld [vmem:[%s463] sm:$0xf]
                %466 = vst [vmem:[%s464] sm:$0xf] %v465
                %v467 = vld [vmem:[%s463 + $0x8] sm:$0xf]
                %468 = vst [vmem:[%s464 + $0x4] sm:$0xf] %v467
                %v469 = vld [vmem:[%s463 + $0x10] sm:$0xf]
                %470 = vst [vmem:[%s464 + $0x8] sm:$0xf] %v469
                %v471 = vld [vmem:[%s463 + $0x18] sm:$0xf]
                %472 = vst [vmem:[%s464 + $0xc] sm:$0xf] %v471
                %v473 = vld [vmem:[%s463 + $0x20] sm:$0xf]
                %474 = vst [vmem:[%s464 + $0x10] sm:$0xf] %v473
                %v475 = vld [vmem:[%s463 + $0x28] sm:$0xf]
                %476 = vst [vmem:[%s464 + $0x14] sm:$0xf] %v475
                %v477 = vld [vmem:[%s463 + $0x30] sm:$0xf]
                %478 = vst [vmem:[%s464 + $0x18] sm:$0xf] %v477
                %v479 = vld [vmem:[%s463 + $0x38] sm:$0xf]
                %480 = vst [vmem:[%s464 + $0x1c] sm:$0xf] %v479
                %v481 = vld [vmem:[%s463 + $0x40] sm:$0xf]
                %482 = vst [vmem:[%s464 + $0x20] sm:$0xf] %v481
                %v483 = vld [vmem:[%s463 + $0x48] sm:$0xf]
                %484 = vst [vmem:[%s464 + $0x24] sm:$0xf] %v483
                %v485 = vld [vmem:[%s463 + $0x50] sm:$0xf]
                %486 = vst [vmem:[%s464 + $0x28] sm:$0xf] %v485
                %v487 = vld [vmem:[%s463 + $0x58] sm:$0xf]
                %488 = vst [vmem:[%s464 + $0x2c] sm:$0xf] %v487
                %v489 = vld [vmem:[%s463 + $0x60] sm:$0xf]
                %490 = vst [vmem:[%s464 + $0x30] sm:$0xf] %v489
                %v491 = vld [vmem:[%s463 + $0x68] sm:$0xf]
                %492 = vst [vmem:[%s464 + $0x34] sm:$0xf] %v491
                %v493 = vld [vmem:[%s463 + $0x70] sm:$0xf]
                %494 = vst [vmem:[%s464 + $0x38] sm:$0xf] %v493
                %v495 = vld [vmem:[%s463 + $0x78] sm:$0xf]
                %496 = vst [vmem:[%s464 + $0x3c] sm:$0xf] %v495
              $region117: #{bayes_mlp_forward.6} parent=111 // loop_footer
                %s462 = sadd.s32 1, %s458
              $region118: #{bayes_mlp_forward.6} parent=111 // loop_footer_branch
                %457 = sbr.rel target = $region114
              $region119: #{bayes_mlp_forward.6} parent=111 // loop_exit
                _
            $region112: #{bayes_mlp_forward.6} parent=103 // pred_fallthru
              _
          $region104: #{bayes_mlp_forward.6} parent=99 // pred_fallthru
            _
          %548 = vnop
        $region100: #{bayes_mlp_forward.6} parent=19 // pred_fallthru
          _
      $region20: #{bayes_mlp_forward.6} parent=5 // pred_fallthru
        _
      %p549 = scmp.le.s32.totalorder 1, %s13
      %p550 = scmp.lt.s32.totalorder %s13, 5
      %p551 = pnand %p549, %p550
      %p552 = pneg %p551
      // Predicated region
      $region138: #{bayes_mlp_forward.6} parent=5 // pred_check
        _
      $region139: #{bayes_mlp_forward.6} parent=5 // pred_check_branch
        %554 = sbr.rel (%p551) target = $region141
      $region140: #{bayes_mlp_forward.6} parent=5 // pred_region
        %s555 = ssub.s32 %s13, 1
        %s556 = sand.u32 %s61, 1
        %s557 = sand.u32 %s61, 1
        %s558 = smul.addr %s557, 128
        %s559 = scalar_lea.vmem [#allocation4], %s558
        // Predicated region
        $region142: #{bayes_mlp_forward.6} parent=140 // pred_check
          %p560 = pneg %p74
        $region143: #{bayes_mlp_forward.6} parent=140 // pred_check_branch
          %562 = sbr.rel (%p560) target = $region145
        $region144: #{bayes_mlp_forward.6} parent=140 // pred_region
          _
        $region145: #{bayes_mlp_forward.6} parent=140 // pred_fallthru
          _
        %s563 = sand.u32 %s89, 1
        %s564 = sand.u32 %s89, 1
        %s565 = smul.addr %s564, 128
        %s566 = scalar_lea.vmem [#allocation5], %s565
        // Predicated region
        $region146: #{bayes_mlp_forward.6} parent=140 // pred_check
          %p567 = pneg %p102
        $region147: #{bayes_mlp_forward.6} parent=140 // pred_check_branch
          %569 = sbr.rel (%p567) target = $region149
        $region148: #{bayes_mlp_forward.6} parent=140 // pred_region
          _
        $region149: #{bayes_mlp_forward.6} parent=140 // pred_fallthru
          _
        %s570 = sand.u32 %s117, 1
        %s571 = sand.u32 %s117, 1
        %s572 = smul.addr %s571, 64
        %s573 = scalar_lea.vmem [#allocation6], %s572
        // Predicated region
        $region150: #{bayes_mlp_forward.6} parent=140 // pred_check
          %p574 = pneg %p130
        $region151: #{bayes_mlp_forward.6} parent=140 // pred_check_branch
          %576 = sbr.rel (%p574) target = $region153
        $region152: #{bayes_mlp_forward.6} parent=140 // pred_region
          _
        $region153: #{bayes_mlp_forward.6} parent=140 // pred_fallthru
          _
        %p577 = pneg %p46
        %p578 = pneg %p43
        %s579 = sand.u32 %s61, 1
        %s580 = sand.u32 %s61, 1
        %s581 = smul.addr %s580, 128
        %s582 = scalar_lea.vmem [#allocation4], %s581
        %p583 = pneg %p74
        %p584 = pneg %p71
        %s585 = sand.u32 %s89, 1
        %s586 = sand.u32 %s89, 1
        %s587 = smul.addr %s586, 128
        %s588 = scalar_lea.vmem [#allocation5], %s587
        %p589 = pneg %p102
        %p590 = pneg %p99
        %s591 = sand.u32 %s117, 1
        %s592 = sand.u32 %s117, 1
        %s593 = smul.addr %s592, 64
        %s594 = scalar_lea.vmem [#allocation6], %s593
        %p595 = pneg %p130
        %p596 = pneg %p127
        %p597 = pneg %p156
        %p598 = pneg %p153
        %p599 = scmp.lt.s32.totalorder %s22, 1
        %s600 = scalar_select %p599, %s22, 1
        %s601 = smul.addr %s600, 8
        %s602 = scalar_lea.vmem %s4, %s601
        %p603 = pneg %p182
        %p604 = pneg %p179
        %p605 = scmp.lt.s32.totalorder %s22, 1
        %s606 = scalar_select %p605, %s22, 1
        %s607 = scalar_lea.vmem %s5, %s606
        %p608 = pneg %p208
        %p609 = pneg %p205
        %p610 = scmp.lt.s32.totalorder %s22, 1
        %s611 = scalar_select %p610, %s22, 1
        %s612 = scalar_lea.vmem %s6, %s611
        %s613 = smul.u32 16, %s23
        %s614 = smul.u32 16, %s23
        %s615 = smul.u32 16, %s23
        %p616 = scmp.lt.s32.totalorder %s22, 1
        %s617 = scalar_select %p616, %s22, 1
        %s618 = smul.addr %s617, 8
        %s619 = scalar_lea.vmem %s4, %s618
        %p620 = scmp.lt.s32.totalorder %s22, 1
        %s621 = scalar_select %p620, %s22, 1
        %s622 = scalar_lea.vmem %s5, %s621
        %p623 = scmp.lt.s32.totalorder %s22, 1
        %s624 = scalar_select %p623, %s22, 1
        %s625 = scalar_lea.vmem %s6, %s624
        %v626 = vld [vmem:[%s559] sm:$0xff]
        %v627 = vld [vmem:[%s559 + $0x8] sm:$0xff]
        %v628 = vld [vmem:[%s559 + $0x10] sm:$0xff]
        %v629 = vld [vmem:[%s559 + $0x18] sm:$0xff]
        %v630 = vld [vmem:[%s559 + $0x20] sm:$0xff]
        %v631 = vld [vmem:[%s559 + $0x28] sm:$0xff]
        %v632 = vld [vmem:[%s559 + $0x30] sm:$0xff]
        %v633 = vld [vmem:[%s559 + $0x38] sm:$0xff]
        %v634 = vld [vmem:[%s559 + $0x40] sm:$0xff]
        %v635 = vld [vmem:[%s559 + $0x48] sm:$0xff]
        %v636 = vld [vmem:[%s559 + $0x50] sm:$0xff]
        %v637 = vld [vmem:[%s559 + $0x58] sm:$0xff]
        %v638 = vld [vmem:[%s559 + $0x60] sm:$0xff]
        %v639 = vld [vmem:[%s559 + $0x68] sm:$0xff]
        %v640 = vld [vmem:[%s559 + $0x70] sm:$0xff]
        %v641 = vld [vmem:[%s559 + $0x78] sm:$0xff]
        %v642 = vld [vmem:[%s566] sm:$0xff]
        %v643 = vld [vmem:[%s566 + $0x8] sm:$0xff]
        %v644 = vld [vmem:[%s566 + $0x10] sm:$0xff]
        %v645 = vld [vmem:[%s566 + $0x18] sm:$0xff]
        %v646 = vld [vmem:[%s566 + $0x20] sm:$0xff]
        %v647 = vld [vmem:[%s566 + $0x28] sm:$0xff]
        %v648 = vld [vmem:[%s566 + $0x30] sm:$0xff]
        %v649 = vld [vmem:[%s566 + $0x38] sm:$0xff]
        %v650 = vld [vmem:[%s566 + $0x40] sm:$0xff]
        %v651 = vld [vmem:[%s566 + $0x48] sm:$0xff]
        %v652 = vld [vmem:[%s566 + $0x50] sm:$0xff]
        %v653 = vld [vmem:[%s566 + $0x58] sm:$0xff]
        %v654 = vld [vmem:[%s566 + $0x60] sm:$0xff]
        %v655 = vld [vmem:[%s566 + $0x68] sm:$0xff]
        %v656 = vld [vmem:[%s566 + $0x70] sm:$0xff]
        %v657 = vld [vmem:[%s566 + $0x78] sm:$0xff]
        %v658 = vmul.f32 %v642, 1.442695
        %v659 = vpow.pop %v658
        %v660 = vmul.f32 %v643, 1.442695
        %v661 = vpow.pop %v660
        %v662 = vmul.f32 %v644, 1.442695
        %v663 = vpow.pop %v662
        %v664 = vmul.f32 %v645, 1.442695
        %v665 = vpow.pop %v664
        %v666 = vmul.f32 %v646, 1.442695
        %v667 = vpow.pop %v666
        %v668 = vmul.f32 %v647, 1.442695
        %v669 = vpow.pop %v668
        %v670 = vmul.f32 %v648, 1.442695
        %v671 = vpow.pop %v670
        %v672 = vmul.f32 %v649, 1.442695
        %v673 = vpow.pop %v672
        %v674 = vmul.f32 %v650, 1.442695
        %v675 = vpow.pop %v674
        %v676 = vmul.f32 %v651, 1.442695
        %v677 = vpow.pop %v676
        %v678 = vmul.f32 %v652, 1.442695
        %v679 = vpow.pop %v678
        %v680 = vmul.f32 %v653, 1.442695
        %v681 = vpow.pop %v680
        %v682 = vmul.f32 %v654, 1.442695
        %v683 = vpow.pop %v682
        %v684 = vmul.f32 %v655, 1.442695
        %v685 = vpow.pop %v684
        %v686 = vmul.f32 %v656, 1.442695
        %v687 = vpow.pop %v686
        %v688 = vmul.f32 %v657, 1.442695
        %v689 = vpow.pop %v688
        %v690 = vadd.f32 %v659, 1.0
        %v691 = vadd.f32 %v661, 1.0
        %v692 = vadd.f32 %v663, 1.0
        %v693 = vadd.f32 %v665, 1.0
        %v694 = vadd.f32 %v667, 1.0
        %v695 = vadd.f32 %v669, 1.0
        %v696 = vadd.f32 %v671, 1.0
        %v697 = vadd.f32 %v673, 1.0
        %v698 = vadd.f32 %v675, 1.0
        %v699 = vadd.f32 %v677, 1.0
        %v700 = vadd.f32 %v679, 1.0
        %v701 = vadd.f32 %v681, 1.0
        %v702 = vadd.f32 %v683, 1.0
        %v703 = vadd.f32 %v685, 1.0
        %v704 = vadd.f32 %v687, 1.0
        %v705 = vadd.f32 %v689, 1.0
        %v706 = vlog2.pop %v690
        %v707 = vmul.f32 %v706, 0.6931472
        %v708 = vlog2.pop %v691
        %v709 = vmul.f32 %v708, 0.6931472
        %v710 = vlog2.pop %v692
        %v711 = vmul.f32 %v710, 0.6931472
        %v712 = vlog2.pop %v693
        %v713 = vmul.f32 %v712, 0.6931472
        %v714 = vlog2.pop %v694
        %v715 = vmul.f32 %v714, 0.6931472
        %v716 = vlog2.pop %v695
        %v717 = vmul.f32 %v716, 0.6931472
        %v718 = vlog2.pop %v696
        %v719 = vmul.f32 %v718, 0.6931472
        %v720 = vlog2.pop %v697
        %v721 = vmul.f32 %v720, 0.6931472
        %v722 = vlog2.pop %v698
        %v723 = vmul.f32 %v722, 0.6931472
        %v724 = vlog2.pop %v699
        %v725 = vmul.f32 %v724, 0.6931472
        %v726 = vlog2.pop %v700
        %v727 = vmul.f32 %v726, 0.6931472
        %v728 = vlog2.pop %v701
        %v729 = vmul.f32 %v728, 0.6931472
        %v730 = vlog2.pop %v702
        %v731 = vmul.f32 %v730, 0.6931472
        %v732 = vlog2.pop %v703
        %v733 = vmul.f32 %v732, 0.6931472
        %v734 = vlog2.pop %v704
        %v735 = vmul.f32 %v734, 0.6931472
        %v736 = vlog2.pop %v705
        %v737 = vmul.f32 %v736, 0.6931472
        %v738 = vrcp.pop %v690
        %v739 = vrcp.pop %v691
        %v740 = vrcp.pop %v692
        %v741 = vrcp.pop %v693
        %v742 = vrcp.pop %v694
        %v743 = vrcp.pop %v695
        %v744 = vrcp.pop %v696
        %v745 = vrcp.pop %v697
        %v746 = vrcp.pop %v698
        %v747 = vrcp.pop %v699
        %v748 = vrcp.pop %v700
        %v749 = vrcp.pop %v701
        %v750 = vrcp.pop %v702
        %v751 = vrcp.pop %v703
        %v752 = vrcp.pop %v704
        %v753 = vrcp.pop %v705
        %v754 = vmul.f32 %v738, %v738
        %v755 = vmul.f32 %v739, %v739
        %v756 = vmul.f32 %v740, %v740
        %v757 = vmul.f32 %v741, %v741
        %v758 = vmul.f32 %v742, %v742
        %v759 = vmul.f32 %v743, %v743
        %v760 = vmul.f32 %v744, %v744
        %v761 = vmul.f32 %v745, %v745
        %v762 = vmul.f32 %v746, %v746
        %v763 = vmul.f32 %v747, %v747
        %v764 = vmul.f32 %v748, %v748
        %v765 = vmul.f32 %v749, %v749
        %v766 = vmul.f32 %v750, %v750
        %v767 = vmul.f32 %v751, %v751
        %v768 = vmul.f32 %v752, %v752
        %v769 = vmul.f32 %v753, %v753
        %v770 = vld [vmem:[%s573] sm:$0xf]
        %v771 = vld [vmem:[%s573 + $0x4] sm:$0xf]
        %v772 = vld [vmem:[%s573 + $0x8] sm:$0xf]
        %v773 = vld [vmem:[%s573 + $0xc] sm:$0xf]
        %v774 = vld [vmem:[%s573 + $0x10] sm:$0xf]
        %v775 = vld [vmem:[%s573 + $0x14] sm:$0xf]
        %v776 = vld [vmem:[%s573 + $0x18] sm:$0xf]
        %v777 = vld [vmem:[%s573 + $0x1c] sm:$0xf]
        %v778 = vld [vmem:[%s573 + $0x20] sm:$0xf]
        %v779 = vld [vmem:[%s573 + $0x24] sm:$0xf]
        %v780 = vld [vmem:[%s573 + $0x28] sm:$0xf]
        %v781 = vld [vmem:[%s573 + $0x2c] sm:$0xf]
        %v782 = vld [vmem:[%s573 + $0x30] sm:$0xf]
        %v783 = vld [vmem:[%s573 + $0x34] sm:$0xf]
        %v784 = vld [vmem:[%s573 + $0x38] sm:$0xf]
        %v785 = vld [vmem:[%s573 + $0x3c] sm:$0xf]
        %v786 = vunpack.c.l.bf16 %v770
        %v787 = vunpack.c.l.bf16 %v771
        %v788 = vunpack.c.l.bf16 %v772
        %v789 = vunpack.c.l.bf16 %v773
        %v790 = vunpack.c.l.bf16 %v774
        %v791 = vunpack.c.l.bf16 %v775
        %v792 = vunpack.c.l.bf16 %v776
        %v793 = vunpack.c.l.bf16 %v777
        %v794 = vunpack.c.l.bf16 %v778
        %v795 = vunpack.c.l.bf16 %v779
        %v796 = vunpack.c.l.bf16 %v780
        %v797 = vunpack.c.l.bf16 %v781
        %v798 = vunpack.c.l.bf16 %v782
        %v799 = vunpack.c.l.bf16 %v783
        %v800 = vunpack.c.l.bf16 %v784
        %v801 = vunpack.c.l.bf16 %v785
        %v802 = vmul.f32 %v707, %v786
        %v803 = vmul.f32 %v709, %v787
        %v804 = vmul.f32 %v711, %v788
        %v805 = vmul.f32 %v713, %v789
        %v806 = vmul.f32 %v715, %v790
        %v807 = vmul.f32 %v717, %v791
        %v808 = vmul.f32 %v719, %v792
        %v809 = vmul.f32 %v721, %v793
        %v810 = vmul.f32 %v723, %v794
        %v811 = vmul.f32 %v725, %v795
        %v812 = vmul.f32 %v727, %v796
        %v813 = vmul.f32 %v729, %v797
        %v814 = vmul.f32 %v731, %v798
        %v815 = vmul.f32 %v733, %v799
        %v816 = vmul.f32 %v735, %v800
        %v817 = vmul.f32 %v737, %v801
        %v818 = vadd.f32 %v626, %v802
        %v819 = vadd.f32 %v627, %v803
        %v820 = vadd.f32 %v628, %v804
        %v821 = vadd.f32 %v629, %v805
        %v822 = vadd.f32 %v630, %v806
        %v823 = vadd.f32 %v631, %v807
        %v824 = vadd.f32 %v632, %v808
        %v825 = vadd.f32 %v633, %v809
        %v826 = vadd.f32 %v634, %v810
        %v827 = vadd.f32 %v635, %v811
        %v828 = vadd.f32 %v636, %v812
        %v829 = vadd.f32 %v637, %v813
        %v830 = vadd.f32 %v638, %v814
        %v831 = vadd.f32 %v639, %v815
        %v832 = vadd.f32 %v640, %v816
        %v833 = vadd.f32 %v641, %v817
        %v834 = vsub.f32 -0.9189385, %v707
        %v835 = vsub.f32 -0.9189385, %v709
        %v836 = vsub.f32 -0.9189385, %v711
        %v837 = vsub.f32 -0.9189385, %v713
        %v838 = vsub.f32 -0.9189385, %v715
        %v839 = vsub.f32 -0.9189385, %v717
        %v840 = vsub.f32 -0.9189385, %v719
        %v841 = vsub.f32 -0.9189385, %v721
        %v842 = vsub.f32 -0.9189385, %v723
        %v843 = vsub.f32 -0.9189385, %v725
        %v844 = vsub.f32 -0.9189385, %v727
        %v845 = vsub.f32 -0.9189385, %v729
        %v846 = vsub.f32 -0.9189385, %v731
        %v847 = vsub.f32 -0.9189385, %v733
        %v848 = vsub.f32 -0.9189385, %v735
        %v849 = vsub.f32 -0.9189385, %v737
        %v850 = vmul.f32 %v802, %v802
        %v851 = vmul.f32 %v803, %v803
        %v852 = vmul.f32 %v804, %v804
        %v853 = vmul.f32 %v805, %v805
        %v854 = vmul.f32 %v806, %v806
        %v855 = vmul.f32 %v807, %v807
        %v856 = vmul.f32 %v808, %v808
        %v857 = vmul.f32 %v809, %v809
        %v858 = vmul.f32 %v810, %v810
        %v859 = vmul.f32 %v811, %v811
        %v860 = vmul.f32 %v812, %v812
        %v861 = vmul.f32 %v813, %v813
        %v862 = vmul.f32 %v814, %v814
        %v863 = vmul.f32 %v815, %v815
        %v864 = vmul.f32 %v816, %v816
        %v865 = vmul.f32 %v817, %v817
        %v866 = vmul.f32 %v850, 0.5
        %v867 = vmul.f32 %v851, 0.5
        %v868 = vmul.f32 %v852, 0.5
        %v869 = vmul.f32 %v853, 0.5
        %v870 = vmul.f32 %v854, 0.5
        %v871 = vmul.f32 %v855, 0.5
        %v872 = vmul.f32 %v856, 0.5
        %v873 = vmul.f32 %v857, 0.5
        %v874 = vmul.f32 %v858, 0.5
        %v875 = vmul.f32 %v859, 0.5
        %v876 = vmul.f32 %v860, 0.5
        %v877 = vmul.f32 %v861, 0.5
        %v878 = vmul.f32 %v862, 0.5
        %v879 = vmul.f32 %v863, 0.5
        %v880 = vmul.f32 %v864, 0.5
        %v881 = vmul.f32 %v865, 0.5
        %v882 = vmul.f32 %v866, %v754
        %v883 = vmul.f32 %v867, %v755
        %v884 = vmul.f32 %v868, %v756
        %v885 = vmul.f32 %v869, %v757
        %v886 = vmul.f32 %v870, %v758
        %v887 = vmul.f32 %v871, %v759
        %v888 = vmul.f32 %v872, %v760
        %v889 = vmul.f32 %v873, %v761
        %v890 = vmul.f32 %v874, %v762
        %v891 = vmul.f32 %v875, %v763
        %v892 = vmul.f32 %v876, %v764
        %v893 = vmul.f32 %v877, %v765
        %v894 = vmul.f32 %v878, %v766
        %v895 = vmul.f32 %v879, %v767
        %v896 = vmul.f32 %v880, %v768
        %v897 = vmul.f32 %v881, %v769
        %v898 = vsub.f32 %v834, %v882
        %v899 = vsub.f32 %v835, %v883
        %v900 = vsub.f32 %v836, %v884
        %v901 = vsub.f32 %v837, %v885
        %v902 = vsub.f32 %v838, %v886
        %v903 = vsub.f32 %v839, %v887
        %v904 = vsub.f32 %v840, %v888
        %v905 = vsub.f32 %v841, %v889
        %v906 = vsub.f32 %v842, %v890
        %v907 = vsub.f32 %v843, %v891
        %v908 = vsub.f32 %v844, %v892
        %v909 = vsub.f32 %v845, %v893
        %v910 = vsub.f32 %v846, %v894
        %v911 = vsub.f32 %v847, %v895
        %v912 = vsub.f32 %v848, %v896
        %v913 = vsub.f32 %v849, %v897
        %v914 = vadd.f32 %v898, %v899
        %v915 = vadd.f32 %v914, %v900
        %v916 = vadd.f32 %v915, %v901
        %v917 = vadd.f32 %v916, %v902
        %v918 = vadd.f32 %v917, %v903
        %v919 = vadd.f32 %v918, %v904
        %v920 = vadd.f32 %v919, %v905
        %v921 = vadd.f32 %v920, %v906
        %v922 = vadd.f32 %v921, %v907
        %v923 = vadd.f32 %v922, %v908
        %v924 = vadd.f32 %v923, %v909
        %v925 = vadd.f32 %v924, %v910
        %v926 = vadd.f32 %v925, %v911
        %v927 = vadd.f32 %v926, %v912
        %v928 = vadd.f32 %v927, %v913
        %929 = vadd.xlane.f32.xlu0 %v928
        %v930 = vpop.xlane.xlu0 %929
        %v931 = vrot.slane %v930, 4
        %v932 = vadd.f32 %v930, %v931
        %v933 = vrot.slane %v932, 2
        %v934 = vadd.f32 %v932, %v933
        %v935 = vrot.slane %v934, 1
        %v936 = vadd.f32 %v934, %v935
        %s937 = vtos %v936
        %v938 = vstv %s937
        %v939 = vmul.f32 %v818, %v818
        %v940 = vmul.f32 %v819, %v819
        %v941 = vmul.f32 %v820, %v820
        %v942 = vmul.f32 %v821, %v821
        %v943 = vmul.f32 %v822, %v822
        %v944 = vmul.f32 %v823, %v823
        %v945 = vmul.f32 %v824, %v824
        %v946 = vmul.f32 %v825, %v825
        %v947 = vmul.f32 %v826, %v826
        %v948 = vmul.f32 %v827, %v827
        %v949 = vmul.f32 %v828, %v828
        %v950 = vmul.f32 %v829, %v829
        %v951 = vmul.f32 %v830, %v830
        %v952 = vmul.f32 %v831, %v831
        %v953 = vmul.f32 %v832, %v832
        %v954 = vmul.f32 %v833, %v833
        %v955 = vmul.f32 %v939, -0.5
        %v956 = vmul.f32 %v940, -0.5
        %v957 = vmul.f32 %v941, -0.5
        %v958 = vmul.f32 %v942, -0.5
        %v959 = vmul.f32 %v943, -0.5
        %v960 = vmul.f32 %v944, -0.5
        %v961 = vmul.f32 %v945, -0.5
        %v962 = vmul.f32 %v946, -0.5
        %v963 = vmul.f32 %v947, -0.5
        %v964 = vmul.f32 %v948, -0.5
        %v965 = vmul.f32 %v949, -0.5
        %v966 = vmul.f32 %v950, -0.5
        %v967 = vmul.f32 %v951, -0.5
        %v968 = vmul.f32 %v952, -0.5
        %v969 = vmul.f32 %v953, -0.5
        %v970 = vmul.f32 %v954, -0.5
        %v971 = vmul.f32 %v939, -124999.5
        %v972 = vmul.f32 %v940, -124999.5
        %v973 = vmul.f32 %v941, -124999.5
        %v974 = vmul.f32 %v942, -124999.5
        %v975 = vmul.f32 %v943, -124999.5
        %v976 = vmul.f32 %v944, -124999.5
        %v977 = vmul.f32 %v945, -124999.5
        %v978 = vmul.f32 %v946, -124999.5
        %v979 = vmul.f32 %v947, -124999.5
        %v980 = vmul.f32 %v948, -124999.5
        %v981 = vmul.f32 %v949, -124999.5
        %v982 = vmul.f32 %v950, -124999.5
        %v983 = vmul.f32 %v951, -124999.5
        %v984 = vmul.f32 %v952, -124999.5
        %v985 = vmul.f32 %v953, -124999.5
        %v986 = vmul.f32 %v954, -124999.5
        %v987 = vmul.f32 %v971, 1.442695
        %v988 = vpow.pop %v987
        %v989 = vmul.f32 %v972, 1.442695
        %v990 = vpow.pop %v989
        %v991 = vmul.f32 %v973, 1.442695
        %v992 = vpow.pop %v991
        %v993 = vmul.f32 %v974, 1.442695
        %v994 = vpow.pop %v993
        %v995 = vmul.f32 %v975, 1.442695
        %v996 = vpow.pop %v995
        %v997 = vmul.f32 %v976, 1.442695
        %v998 = vpow.pop %v997
        %v999 = vmul.f32 %v977, 1.442695
        %v1000 = vpow.pop %v999
        %v1001 = vmul.f32 %v978, 1.442695
        %v1002 = vpow.pop %v1001
        %v1003 = vmul.f32 %v979, 1.442695
        %v1004 = vpow.pop %v1003
        %v1005 = vmul.f32 %v980, 1.442695
        %v1006 = vpow.pop %v1005
        %v1007 = vmul.f32 %v981, 1.442695
        %v1008 = vpow.pop %v1007
        %v1009 = vmul.f32 %v982, 1.442695
        %v1010 = vpow.pop %v1009
        %v1011 = vmul.f32 %v983, 1.442695
        %v1012 = vpow.pop %v1011
        %v1013 = vmul.f32 %v984, 1.442695
        %v1014 = vpow.pop %v1013
        %v1015 = vmul.f32 %v985, 1.442695
        %v1016 = vpow.pop %v1015
        %v1017 = vmul.f32 %v986, 1.442695
        %v1018 = vpow.pop %v1017
        %v1019 = vmul.f32 %v988, 250.0
        %v1020 = vmul.f32 %v990, 250.0
        %v1021 = vmul.f32 %v992, 250.0
        %v1022 = vmul.f32 %v994, 250.0
        %v1023 = vmul.f32 %v996, 250.0
        %v1024 = vmul.f32 %v998, 250.0
        %v1025 = vmul.f32 %v1000, 250.0
        %v1026 = vmul.f32 %v1002, 250.0
        %v1027 = vmul.f32 %v1004, 250.0
        %v1028 = vmul.f32 %v1006, 250.0
        %v1029 = vmul.f32 %v1008, 250.0
        %v1030 = vmul.f32 %v1010, 250.0
        %v1031 = vmul.f32 %v1012, 250.0
        %v1032 = vmul.f32 %v1014, 250.0
        %v1033 = vmul.f32 %v1016, 250.0
        %v1034 = vmul.f32 %v1018, 250.0
        %v1035 = vadd.f32 %v1019, 0.5
        %v1036 = vadd.f32 %v1020, 0.5
        %v1037 = vadd.f32 %v1021, 0.5
        %v1038 = vadd.f32 %v1022, 0.5
        %v1039 = vadd.f32 %v1023, 0.5
        %v1040 = vadd.f32 %v1024, 0.5
        %v1041 = vadd.f32 %v1025, 0.5
        %v1042 = vadd.f32 %v1026, 0.5
        %v1043 = vadd.f32 %v1027, 0.5
        %v1044 = vadd.f32 %v1028, 0.5
        %v1045 = vadd.f32 %v1029, 0.5
        %v1046 = vadd.f32 %v1030, 0.5
        %v1047 = vadd.f32 %v1031, 0.5
        %v1048 = vadd.f32 %v1032, 0.5
        %v1049 = vadd.f32 %v1033, 0.5
        %v1050 = vadd.f32 %v1034, 0.5
        %v1051 = vlog2.pop %v1035
        %v1052 = vmul.f32 %v1051, 0.6931472
        %v1053 = vlog2.pop %v1036
        %v1054 = vmul.f32 %v1053, 0.6931472
        %v1055 = vlog2.pop %v1037
        %v1056 = vmul.f32 %v1055, 0.6931472
        %v1057 = vlog2.pop %v1038
        %v1058 = vmul.f32 %v1057, 0.6931472
        %v1059 = vlog2.pop %v1039
        %v1060 = vmul.f32 %v1059, 0.6931472
        %v1061 = vlog2.pop %v1040
        %v1062 = vmul.f32 %v1061, 0.6931472
        %v1063 = vlog2.pop %v1041
        %v1064 = vmul.f32 %v1063, 0.6931472
        %v1065 = vlog2.pop %v1042
        %v1066 = vmul.f32 %v1065, 0.6931472
        %v1067 = vlog2.pop %v1043
        %v1068 = vmul.f32 %v1067, 0.6931472
        %v1069 = vlog2.pop %v1044
        %v1070 = vmul.f32 %v1069, 0.6931472
        %v1071 = vlog2.pop %v1045
        %v1072 = vmul.f32 %v1071, 0.6931472
        %v1073 = vlog2.pop %v1046
        %v1074 = vmul.f32 %v1073, 0.6931472
        %v1075 = vlog2.pop %v1047
        %v1076 = vmul.f32 %v1075, 0.6931472
        %v1077 = vlog2.pop %v1048
        %v1078 = vmul.f32 %v1077, 0.6931472
        %v1079 = vlog2.pop %v1049
        %v1080 = vmul.f32 %v1079, 0.6931472
        %v1081 = vlog2.pop %v1050
        %v1082 = vmul.f32 %v1081, 0.6931472
        %v1083 = vadd.f32 %v955, %v1052
        %v1084 = vadd.f32 %v956, %v1054
        %v1085 = vadd.f32 %v957, %v1056
        %v1086 = vadd.f32 %v958, %v1058
        %v1087 = vadd.f32 %v959, %v1060
        %v1088 = vadd.f32 %v960, %v1062
        %v1089 = vadd.f32 %v961, %v1064
        %v1090 = vadd.f32 %v962, %v1066
        %v1091 = vadd.f32 %v963, %v1068
        %v1092 = vadd.f32 %v964, %v1070
        %v1093 = vadd.f32 %v965, %v1072
        %v1094 = vadd.f32 %v966, %v1074
        %v1095 = vadd.f32 %v967, %v1076
        %v1096 = vadd.f32 %v968, %v1078
        %v1097 = vadd.f32 %v969, %v1080
        %v1098 = vadd.f32 %v970, %v1082
        %v1099 = vadd.f32 %v1083, %v1084
        %v1100 = vadd.f32 %v1099, %v1085
        %v1101 = vadd.f32 %v1100, %v1086
        %v1102 = vadd.f32 %v1101, %v1087
        %v1103 = vadd.f32 %v1102, %v1088
        %v1104 = vadd.f32 %v1103, %v1089
        %v1105 = vadd.f32 %v1104, %v1090
        %v1106 = vadd.f32 %v1105, %v1091
        %v1107 = vadd.f32 %v1106, %v1092
        %v1108 = vadd.f32 %v1107, %v1093
        %v1109 = vadd.f32 %v1108, %v1094
        %v1110 = vadd.f32 %v1109, %v1095
        %v1111 = vadd.f32 %v1110, %v1096
        %v1112 = vadd.f32 %v1111, %v1097
        %v1113 = vadd.f32 %v1112, %v1098
        %1114 = vadd.xlane.f32.xlu0 %v1113
        %v1115 = vpop.xlane.xlu0 %1114
        %v1116 = vrot.slane %v1115, 4
        %v1117 = vadd.f32 %v1115, %v1116
        %v1118 = vrot.slane %v1117, 2
        %v1119 = vadd.f32 %v1117, %v1118
        %v1120 = vrot.slane %v1119, 1
        %v1121 = vadd.f32 %v1119, %v1120
        %s1122 = vtos %v1121
        %v1123 = vstv %s1122
        %s1124 = smul.u32 %s23, 128
        %s1125 = sshra.s32 %s1124, 7
        %s1126 = sand.u32 %s1124, 127
        %s1127 = smul.addr %s1125, 8
        %s1128 = scalar_lea.vmem %s0, %s1127
        %v1129 = vld [vmem:[%s1128] sm:$0xff]
        %1130 = vmatprep.subr.mxu0 0.0
        %1131 = vmatpush1.msra.mxu0 %v818
        %1132 = vmatprep.subr.mxu0 0.0
        %1133 = vmatpush1.msra.mxu0 %v819
        %1134 = vmatprep.subr.mxu0 0.0
        %1135 = vmatpush1.msra.mxu0 %v820
        %1136 = vmatprep.subr.mxu0 0.0
        %1137 = vmatpush1.msra.mxu0 %v821
        %1138 = vmatprep.subr.mxu0 0.0
        %1139 = vmatpush1.msra.mxu0 %v822
        %1140 = vmatprep.subr.mxu0 0.0
        %1141 = vmatpush1.msra.mxu0 %v823
        %1142 = vmatprep.subr.mxu0 0.0
        %1143 = vmatpush1.msra.mxu0 %v824
        %1144 = vmatprep.subr.mxu0 0.0
        %1145 = vmatpush1.msra.mxu0 %v825
        %1146 = vmatprep.subr.mxu0 0.0
        %1147 = vmatpush1.msra.mxu0 %v826
        %1148 = vmatprep.subr.mxu0 0.0
        %1149 = vmatpush1.msra.mxu0 %v827
        %1150 = vmatprep.subr.mxu0 0.0
        %1151 = vmatpush1.msra.mxu0 %v828
        %1152 = vmatprep.subr.mxu0 0.0
        %1153 = vmatpush1.msra.mxu0 %v829
        %1154 = vmatprep.subr.mxu0 0.0
        %1155 = vmatpush1.msra.mxu0 %v830
        %1156 = vmatprep.subr.mxu0 0.0
        %1157 = vmatpush1.msra.mxu0 %v831
        %1158 = vmatprep.subr.mxu0 0.0
        %1159 = vmatpush1.msra.mxu0 %v832
        %1160 = vmatprep.subr.mxu0 0.0
        %1161 = vmatpush1.msra.mxu0 %v833
        %1162 = vmatprep.subr.mxu0 0.0
        %1163 = vmatpush1.msra.mxu0 0.0
        %1164 = vmatprep.subr.mxu0 0.0
        %1165 = vmatpush1.msra.mxu0 0.0
        %1166 = vmatprep.subr.mxu0 0.0
        %1167 = vmatpush1.msra.mxu0 0.0
        %1168 = vmatprep.subr.mxu0 0.0
        %1169 = vmatpush1.msra.mxu0 0.0
        %1170 = vmatprep.subr.mxu0 0.0
        %1171 = vmatpush1.msra.mxu0 0.0
        %1172 = vmatprep.subr.mxu0 0.0
        %1173 = vmatpush1.msra.mxu0 0.0
        %1174 = vmatprep.subr.mxu0 0.0
        %1175 = vmatpush1.msra.mxu0 0.0
        %1176 = vmatprep.subr.mxu0 0.0
        %1177 = vmatpush1.msra.mxu0 0.0
        %1178 = vmatprep.subr.mxu0 0.0
        %1179 = vmatpush1.msra.mxu0 0.0
        %1180 = vmatprep.subr.mxu0 0.0
        %1181 = vmatpush1.msra.mxu0 0.0
        %1182 = vmatprep.subr.mxu0 0.0
        %1183 = vmatpush1.msra.mxu0 0.0
        %1184 = vmatprep.subr.mxu0 0.0
        %1185 = vmatpush1.msra.mxu0 0.0
        %1186 = vmatprep.subr.mxu0 0.0
        %1187 = vmatpush1.msra.mxu0 0.0
        %1188 = vmatprep.subr.mxu0 0.0
        %1189 = vmatpush1.msra.mxu0 0.0
        %1190 = vmatprep.subr.mxu0 0.0
        %1191 = vmatpush1.msra.mxu0 0.0
        %1192 = vmatprep.subr.mxu0 0.0
        %1193 = vmatpush1.msra.mxu0 0.0
        %1194 = vmatprep.mubr.f32.mxu0 0.0
        %1195 = vmatmul.mubr.f32.gmra.mrb[0].mxu0 %v1129
        %v1196 = vpop.f32.mrb[0].mxu0
        %v1197 = vadd.f32 0.0, %v1196
        %v1198 = vpop.f32.mrb[0].mxu0
        %1199 = vdwg.mxu0
        %p1200 = scmp.eq.s32.totalorder %s23, 0
        // Predicated region
        $region154: #{bayes_mlp_forward.6} parent=140 // pred_check
          %p1201 = pneg %p1200
        $region155: #{bayes_mlp_forward.6} parent=140 // pred_check_branch
          %1203 = sbr.rel (%p1201) target = $region157
        $region156: #{bayes_mlp_forward.6} parent=140 // pred_region
          %vm1204 = vcmask 0
          %1205 = vst.msk [vmem:[#allocation2] sm:$0x1] %vm1204, %v938
          %1206 = vst.msk [vmem:[#allocation3] sm:$0x1] %vm1204, %v1123
          %1207 = vst [vmem:[%s619] sm:$0xff] %v1197
        $region157: #{bayes_mlp_forward.6} parent=140 // pred_fallthru
          _
        %p1208 = scmp.ne.s32.totalorder %s23, 0
        // Predicated region
        $region158: #{bayes_mlp_forward.6} parent=140 // pred_check
          %p1209 = pneg %p1208
        $region159: #{bayes_mlp_forward.6} parent=140 // pred_check_branch
          %1211 = sbr.rel (%p1209) target = $region161
        $region160: #{bayes_mlp_forward.6} parent=140 // pred_region
          %v1212 = vld [vmem:[#allocation2] sm:$0x1]
          %v1213 = vadd.f32 %v1212, %v938
          %vm1214 = vcmask 0
          %1215 = vst.msk [vmem:[#allocation2] sm:$0x1] %vm1214, %v1213
          %v1216 = vld [vmem:[#allocation3] sm:$0x1]
          %v1217 = vadd.f32 %v1216, %v1123
          %1218 = vst.msk [vmem:[#allocation3] sm:$0x1] %vm1214, %v1217
          %v1219 = vld [vmem:[%s619] sm:$0xff]
          %v1220 = vadd.f32 %v1219, %v1197
          %1221 = vst [vmem:[%s619] sm:$0xff] %v1220
        $region161: #{bayes_mlp_forward.6} parent=140 // pred_fallthru
          _
        %p1222 = scmp.eq.s32.totalorder %s23, 1
        // Predicated region
        $region162: #{bayes_mlp_forward.6} parent=140 // pred_check
          %p1223 = pneg %p1222
        $region163: #{bayes_mlp_forward.6} parent=140 // pred_check_branch
          %1225 = sbr.rel (%p1223) target = $region165
        $region164: #{bayes_mlp_forward.6} parent=140 // pred_region
          %v1226 = vld [vmem:[#allocation2] sm:$0x1]
          %vm1227 = vcmask 0
          %1228 = vst.msk [vmem:[%s622] sm:$0x1] %vm1227, %v1226
          %v1229 = vld [vmem:[#allocation3] sm:$0x1]
          %1230 = vst.msk [vmem:[%s625] sm:$0x1] %vm1227, %v1229
        $region165: #{bayes_mlp_forward.6} parent=140 // pred_fallthru
          _
        %p1231 = scmp.lt.s32.totalorder %s22, 1
        %s1232 = scalar_select %p1231, %s22, 1
        %s1233 = smul.addr %s1232, 8
        %s1234 = scalar_lea.vmem %s4, %s1233
        %p1235 = scmp.lt.s32.totalorder %s22, 1
        %s1236 = scalar_select %p1235, %s22, 1
        %s1237 = scalar_lea.vmem %s5, %s1236
        %p1238 = scmp.lt.s32.totalorder %s22, 1
        %s1239 = scalar_select %p1238, %s22, 1
        %s1240 = scalar_lea.vmem %s6, %s1239
        // Predicated region
        $region166: #{bayes_mlp_forward.6} parent=140 // pred_check
          %p1241 = pneg %p153
        $region167: #{bayes_mlp_forward.6} parent=140 // pred_check_branch
          %1243 = sbr.rel (%p1241) target = $region169
        $region168: #{bayes_mlp_forward.6} parent=140 // pred_region
          _
        $region169: #{bayes_mlp_forward.6} parent=140 // pred_fallthru
          _
        // Predicated region
        $region170: #{bayes_mlp_forward.6} parent=140 // pred_check
          %p1244 = pneg %p179
        $region171: #{bayes_mlp_forward.6} parent=140 // pred_check_branch
          %1246 = sbr.rel (%p1244) target = $region173
        $region172: #{bayes_mlp_forward.6} parent=140 // pred_region
          _
        $region173: #{bayes_mlp_forward.6} parent=140 // pred_fallthru
          _
        // Predicated region
        $region174: #{bayes_mlp_forward.6} parent=140 // pred_check
          %p1247 = pneg %p205
        $region175: #{bayes_mlp_forward.6} parent=140 // pred_check_branch
          %1249 = sbr.rel (%p1247) target = $region177
        $region176: #{bayes_mlp_forward.6} parent=140 // pred_region
          _
        $region177: #{bayes_mlp_forward.6} parent=140 // pred_fallthru
          _
      $region141: #{bayes_mlp_forward.6} parent=5 // pred_fallthru
        _
      %p1250 = scmp.le.s32.totalorder 2, %s13
      // Predicated region
      $region178: #{bayes_mlp_forward.6} parent=5 // pred_check
        %p1251 = pneg %p1250
      $region179: #{bayes_mlp_forward.6} parent=5 // pred_check_branch
        %1253 = sbr.rel (%p1251) target = $region181
      $region180: #{bayes_mlp_forward.6} parent=5 // pred_region
        %s1254 = ssub.s32 %s13, 2
        // Predicated region
        $region182: #{bayes_mlp_forward.6} parent=180 // pred_check
          %p1255 = pneg %p159
        $region183: #{bayes_mlp_forward.6} parent=180 // pred_check_branch
          %1257 = sbr.rel (%p1255) target = $region185
        $region184: #{bayes_mlp_forward.6} parent=180 // pred_region
          %p1258 = scmp.lt.s32.totalorder %s24, 1
          %s1259 = scalar_select %p1258, %s24, 1
          %s1260 = smul.addr %s1259, 8
          %s1261 = scalar_lea.vmem %s4, %s1260
        $region185: #{bayes_mlp_forward.6} parent=180 // pred_fallthru
          _
        // Predicated region
        $region186: #{bayes_mlp_forward.6} parent=180 // pred_check
          %p1262 = pneg %p185
        $region187: #{bayes_mlp_forward.6} parent=180 // pred_check_branch
          %1264 = sbr.rel (%p1262) target = $region189
        $region188: #{bayes_mlp_forward.6} parent=180 // pred_region
          %p1265 = scmp.lt.s32.totalorder %s24, 1
          %s1266 = scalar_select %p1265, %s24, 1
          %s1267 = scalar_lea.vmem %s5, %s1266
        $region189: #{bayes_mlp_forward.6} parent=180 // pred_fallthru
          _
        // Predicated region
        $region190: #{bayes_mlp_forward.6} parent=180 // pred_check
          %p1268 = pneg %p211
        $region191: #{bayes_mlp_forward.6} parent=180 // pred_check_branch
          %1270 = sbr.rel (%p1268) target = $region193
        $region192: #{bayes_mlp_forward.6} parent=180 // pred_region
          %p1271 = scmp.lt.s32.totalorder %s24, 1
          %s1272 = scalar_select %p1271, %s24, 1
          %s1273 = scalar_lea.vmem %s6, %s1272
        $region193: #{bayes_mlp_forward.6} parent=180 // pred_fallthru
          _
      $region181: #{bayes_mlp_forward.6} parent=5 // pred_fallthru
        _
    $region6: #{bayes_mlp_forward.6} parent=1 // loop_footer
      %s17 = sadd.s32 1, %s13
    $region7: #{bayes_mlp_forward.6} parent=1 // loop_footer_branch
      %12 = sbr.rel target = $region3
    $region8: #{bayes_mlp_forward.6} parent=1 // loop_exit
      _

// kernel: bayes_mlp_forward.9
$region0: #{bayes_mlp_forward.9}
  #allocation0 [shape = 'u32[]', space=smem, size = 0x4, offset = 0x4, fixed_abs, tag = 'smem constant byte address 0x4 - core index']
  #allocation1 [shape = 'u32[144,128]{1,0:T(1,128)}', space=vmem, size = 0x12000, scoped, tag = 'internal scratch']
  #allocation2 [shape = 'f32[1,1]{1,0:T(1,128)}', space=vmem, size = 0x200, scoped, tag = 'scratch operand']
  #allocation3 [shape = 'f32[1,1]{1,0:T(1,128)}', space=vmem, size = 0x200, scoped, tag = 'scratch operand']
  %s0 = inlined_call_operand.vmem [shape: f32[8,256], index: 0, kind: input, shape index: {}]
  %s1 = inlined_call_operand.vmem [shape: f32[256,128], index: 1, kind: input, shape index: {}]
  %s2 = inlined_call_operand.vmem [shape: f32[256,128], index: 2, kind: input, shape index: {}]
  %s3 = inlined_call_operand.vmem [shape: bf16[256,128], index: 3, kind: input, shape index: {}]
  %s4 = inlined_call_operand.vmem [shape: f32[8,128], index: 4, kind: output, shape index: {0}]
  %s5 = inlined_call_operand.hbm [shape: f32[1,1,1], index: 5, kind: output, shape index: {1}]
  %s6 = inlined_call_operand.hbm [shape: f32[1,1,1], index: 6, kind: output, shape index: {2}]
  %7 = xla_tuple %s4, %s5, %s6
  %s8 = sld [smem:[#allocation0]]
  $region77: #{bayes_mlp_forward.9} parent=0
    _
  %s10 = ssub.s32 1, %s8
  %s11 = scalar_select 0, %s10, %s8
  $region1: #{bayes_mlp_forward.9} parent=0
    #allocation4 [shape = 'u8[512]{0}', space=vmem, size = 0x400, scoped, tag = 'output window, operand 1, single buffered']
    #allocation5 [shape = 's32[2]{0}', space=sflag, size = 0x8, scoped, tag = 'scoped memory for bayes_mlp_forward.9']
    #allocation6 [shape = 'u8[512]{0}', space=vmem, size = 0x400, scoped, tag = 'output window, operand 2, single buffered']
    #allocation7 [shape = 's32[1]{0}', space=sflag, size = 0x4, scoped, tag = 'scoped memory for bayes_mlp_forward.9']
    %12 = vsyncpa [#allocation5], 0
    %13 = vsyncpa [#allocation7], 0
    loop: start=0, step=1, limit=4
    $region2: #{bayes_mlp_forward.9} parent=1 // loop_pre_header
      _
    $region3: #{bayes_mlp_forward.9} parent=1 // loop_header
      %s15 = sphi 0, %s19
      %p16 = scmp.ge.s32.totalorder %s15, 4
      %s22 = sphi 0, %s34
      %s23 = sphi 0, %s30
      %s24 = sphi 0, %s22
      %s25 = sphi 0, %s23
      %s26 = sphi 0, %s24
      %s27 = sphi 0, %s25
      %s35 = sphi 0, %s35
      %s37 = sphi 0, %s35
      %s38 = sphi 0, %s37
      %s52 = sphi 0, %s38
      %s60 = sphi 0, %s62
      %s63 = sphi 0, %s60
      %s64 = sphi 0, %s63
      %s80 = sphi 0, %s64
      %s88 = sphi 0, %s90
      %s91 = sphi 0, %s88
      %s92 = sphi 0, %s91
      %s108 = sphi 0, %s92
      %s116 = sphi 0, %s118
      %s119 = sphi 0, %s116
      %s120 = sphi 0, %s119
      %s136 = sphi 0, %s120
      %s142 = sphi 0, %s144
      %s145 = sphi 0, %s142
      %s146 = sphi 0, %s145
      %s162 = sphi 0, %s146
      %s168 = sphi 0, %s170
      %s171 = sphi 0, %s168
      %s172 = sphi 0, %s171
      %s188 = sphi 0, %s172
      %s194 = sphi 0, %s196
      %s197 = sphi 0, %s194
      %s198 = sphi 0, %s197
      %s214 = sphi 0, %s198
    $region4: #{bayes_mlp_forward.9} parent=1 // loop_header_branch
      %18 = sbr.rel (%p16) target = $region8
    $region5: #{bayes_mlp_forward.9} parent=1 // loop_body
      %s20 = ssub.s32 %s15, 1
      %s21 = ssub.s32 %s15, 2
      %s28 = sadd.s32 1, %s23
      %p29 = scmp.ge.s32.totalorder %s28, 2
      %s30 = scalar_select %p29, 0, %s28
      %s31 = sadd.s32 1, %s22
      %s32 = scalar_select %p29, %s31, %s22
      %p33 = scmp.ge.s32.totalorder %s32, 1
      %s34 = scalar_select %p33, 0, %s32
      %s36 = sadd.s32 %s35, 1
      %p39 = scmp.eq.s32.totalorder %s15, 1
      %p40 = scmp.ne.s32.totalorder %s35, %s37
      %p41 = scmp.eq.s32.totalorder %s15, 0
      %p42 = por %p40, %p41
      %p43 = scmp.ne.s32.totalorder %s35, %s37
      %p44 = scmp.eq.s32.totalorder %s20, 1
      %p45 = por %p43, %p44
      %p46 = scmp.ne.s32.totalorder %s37, %s38
      %p47 = scmp.eq.s32.totalorder %s20, 0
      %p48 = por %p46, %p47
      %p49 = scmp.ne.s32.totalorder %s37, %s38
      %p50 = scmp.eq.s32.totalorder %s21, 1
      %p51 = por %p49, %p50
      %p53 = scmp.ne.s32.totalorder %s38, %s52
      %p54 = scmp.eq.s32.totalorder %s21, 0
      %p55 = por %p53, %p54
      %s56 = ssub.s32 %s23, %s30
      %s57 = ssub.s32 %s22, %s34
      %s58 = sor.u32 %s56, %s57
      %p59 = scmp.eq.s32.totalorder %s58, 0
      %s61 = sadd.s32 %s60, 1
      %s62 = scalar_select %p59, %s60, %s61
      %p65 = pneg %p59
      %p66 = scmp.eq.s32.totalorder %s15, 1
      %p67 = por %p65, %p66
      %p68 = scmp.ne.s32.totalorder %s60, %s63
      %p69 = scmp.eq.s32.totalorder %s15, 0
      %p70 = por %p68, %p69
      %p71 = scmp.ne.s32.totalorder %s60, %s63
      %p72 = scmp.eq.s32.totalorder %s20, 1
      %p73 = por %p71, %p72
      %p74 = scmp.ne.s32.totalorder %s63, %s64
      %p75 = scmp.eq.s32.totalorder %s20, 0
      %p76 = por %p74, %p75
      %p77 = scmp.ne.s32.totalorder %s63, %s64
      %p78 = scmp.eq.s32.totalorder %s21, 1
      %p79 = por %p77, %p78
      %p81 = scmp.ne.s32.totalorder %s64, %s80
      %p82 = scmp.eq.s32.totalorder %s21, 0
      %p83 = por %p81, %p82
      %s84 = ssub.s32 %s23, %s30
      %s85 = ssub.s32 %s22, %s34
      %s86 = sor.u32 %s84, %s85
      %p87 = scmp.eq.s32.totalorder %s86, 0
      %s89 = sadd.s32 %s88, 1
      %s90 = scalar_select %p87, %s88, %s89
      %p93 = pneg %p87
      %p94 = scmp.eq.s32.totalorder %s15, 1
      %p95 = por %p93, %p94
      %p96 = scmp.ne.s32.totalorder %s88, %s91
      %p97 = scmp.eq.s32.totalorder %s15, 0
      %p98 = por %p96, %p97
      %p99 = scmp.ne.s32.totalorder %s88, %s91
      %p100 = scmp.eq.s32.totalorder %s20, 1
      %p101 = por %p99, %p100
      %p102 = scmp.ne.s32.totalorder %s91, %s92
      %p103 = scmp.eq.s32.totalorder %s20, 0
      %p104 = por %p102, %p103
      %p105 = scmp.ne.s32.totalorder %s91, %s92
      %p106 = scmp.eq.s32.totalorder %s21, 1
      %p107 = por %p105, %p106
      %p109 = scmp.ne.s32.totalorder %s92, %s108
      %p110 = scmp.eq.s32.totalorder %s21, 0
      %p111 = por %p109, %p110
      %s112 = ssub.s32 %s23, %s30
      %s113 = ssub.s32 %s22, %s34
      %s114 = sor.u32 %s112, %s113
      %p115 = scmp.eq.s32.totalorder %s114, 0
      %s117 = sadd.s32 %s116, 1
      %s118 = scalar_select %p115, %s116, %s117
      %p121 = pneg %p115
      %p122 = scmp.eq.s32.totalorder %s15, 1
      %p123 = por %p121, %p122
      %p124 = scmp.ne.s32.totalorder %s116, %s119
      %p125 = scmp.eq.s32.totalorder %s15, 0
      %p126 = por %p124, %p125
      %p127 = scmp.ne.s32.totalorder %s116, %s119
      %p128 = scmp.eq.s32.totalorder %s20, 1
      %p129 = por %p127, %p128
      %p130 = scmp.ne.s32.totalorder %s119, %s120
      %p131 = scmp.eq.s32.totalorder %s20, 0
      %p132 = por %p130, %p131
      %p133 = scmp.ne.s32.totalorder %s119, %s120
      %p134 = scmp.eq.s32.totalorder %s21, 1
      %p135 = por %p133, %p134
      %p137 = scmp.ne.s32.totalorder %s120, %s136
      %p138 = scmp.eq.s32.totalorder %s21, 0
      %p139 = por %p137, %p138
      %s140 = ssub.s32 %s22, %s34
      %p141 = scmp.eq.s32.totalorder %s140, 0
      %s143 = sadd.s32 %s142, 1
      %s144 = scalar_select %p141, %s142, %s143
      %p147 = pneg %p141
      %p148 = scmp.eq.s32.totalorder %s15, 1
      %p149 = por %p147, %p148
      %p150 = scmp.ne.s32.totalorder %s142, %s145
      %p151 = scmp.eq.s32.totalorder %s15, 0
      %p152 = por %p150, %p151
      %p153 = scmp.ne.s32.totalorder %s142, %s145
      %p154 = scmp.eq.s32.totalorder %s20, 1
      %p155 = por %p153, %p154
      %p156 = scmp.ne.s32.totalorder %s145, %s146
      %p157 = scmp.eq.s32.totalorder %s20, 0
      %p158 = por %p156, %p157
      %p159 = scmp.ne.s32.totalorder %s145, %s146
      %p160 = scmp.eq.s32.totalorder %s21, 1
      %p161 = por %p159, %p160
      %p163 = scmp.ne.s32.totalorder %s146, %s162
      %p164 = scmp.eq.s32.totalorder %s21, 0
      %p165 = por %p163, %p164
      %s166 = ssub.s32 %s22, %s34
      %p167 = scmp.eq.s32.totalorder %s166, 0
      %s169 = sadd.s32 %s168, 1
      %s170 = scalar_select %p167, %s168, %s169
      %p173 = pneg %p167
      %p174 = scmp.eq.s32.totalorder %s15, 1
      %p175 = por %p173, %p174
      %p176 = scmp.ne.s32.totalorder %s168, %s171
      %p177 = scmp.eq.s32.totalorder %s15, 0
      %p178 = por %p176, %p177
      %p179 = scmp.ne.s32.totalorder %s168, %s171
      %p180 = scmp.eq.s32.totalorder %s20, 1
      %p181 = por %p179, %p180
      %p182 = scmp.ne.s32.totalorder %s171, %s172
      %p183 = scmp.eq.s32.totalorder %s20, 0
      %p184 = por %p182, %p183
      %p185 = scmp.ne.s32.totalorder %s171, %s172
      %p186 = scmp.eq.s32.totalorder %s21, 1
      %p187 = por %p185, %p186
      %p189 = scmp.ne.s32.totalorder %s172, %s188
      %p190 = scmp.eq.s32.totalorder %s21, 0
      %p191 = por %p189, %p190
      %s192 = ssub.s32 %s22, %s34
      %p193 = scmp.eq.s32.totalorder %s192, 0
      %s195 = sadd.s32 %s194, 1
      %s196 = scalar_select %p193, %s194, %s195
      %p199 = pneg %p193
      %p200 = scmp.eq.s32.totalorder %s15, 1
      %p201 = por %p199, %p200
      %p202 = scmp.ne.s32.totalorder %s194, %s197
      %p203 = scmp.eq.s32.totalorder %s15, 0
      %p204 = por %p202, %p203
      %p205 = scmp.ne.s32.totalorder %s194, %s197
      %p206 = scmp.eq.s32.totalorder %s20, 1
      %p207 = por %p205, %p206
      %p208 = scmp.ne.s32.totalorder %s197, %s198
      %p209 = scmp.eq.s32.totalorder %s20, 0
      %p210 = por %p208, %p209
      %p211 = scmp.ne.s32.totalorder %s197, %s198
      %p212 = scmp.eq.s32.totalorder %s21, 1
      %p213 = por %p211, %p212
      %p215 = scmp.ne.s32.totalorder %s198, %s214
      %p216 = scmp.eq.s32.totalorder %s21, 0
      %p217 = por %p215, %p216
      %p218 = scmp.le.s32.totalorder 1, %s15
      %p219 = scmp.lt.s32.totalorder %s15, 3
      %p220 = pnand %p218, %p219
      %p221 = pneg %p220
      // Predicated region
      $region9: #{bayes_mlp_forward.9} parent=5 // pred_check
        _
      $region10: #{bayes_mlp_forward.9} parent=5 // pred_check_branch
        %223 = sbr.rel (%p220) target = $region12
      $region11: #{bayes_mlp_forward.9} parent=5 // pred_region
        %s224 = ssub.s32 %s15, 1
        // Predicated region
        $region13: #{bayes_mlp_forward.9} parent=11 // pred_check
          %p225 = pneg %p48
        $region14: #{bayes_mlp_forward.9} parent=11 // pred_check_branch
          %227 = sbr.rel (%p225) target = $region16
        $region15: #{bayes_mlp_forward.9} parent=11 // pred_region
          _
        $region16: #{bayes_mlp_forward.9} parent=11 // pred_fallthru
          _
      $region12: #{bayes_mlp_forward.9} parent=5 // pred_fallthru
        _
      %p228 = scmp.lt.s32.totalorder %s15, 2
      // Predicated region
      $region17: #{bayes_mlp_forward.9} parent=5 // pred_check
        %p229 = pneg %p228
      $region18: #{bayes_mlp_forward.9} parent=5 // pred_check_branch
        %231 = sbr.rel (%p229) target = $region20
      $region19: #{bayes_mlp_forward.9} parent=5 // pred_region
        // Predicated region
        $region21: #{bayes_mlp_forward.9} parent=19 // pred_check
          %p232 = pneg %p70
        $region22: #{bayes_mlp_forward.9} parent=19 // pred_check_branch
          %234 = sbr.rel (%p232) target = $region24
        $region23: #{bayes_mlp_forward.9} parent=19 // pred_region
          %s235 = smul.u32 16, %s23
          %p236 = scmp.lt.s32.totalorder %s235, 31
          %s237 = scalar_select %p236, %s235, 31
          %p238 = scmp.lt.s32.totalorder %s22, 0
          %s239 = scalar_select %p238, %s22, 0
          %s240 = sadd.s32 %s239, %s237
          %s241 = smul.addr %s240, 8
          %s242 = scalar_lea.vmem %s1, %s241
          %s243 = smul.u32 16, %s23
        $region24: #{bayes_mlp_forward.9} parent=19 // pred_fallthru
          _
        // Predicated region
        $region25: #{bayes_mlp_forward.9} parent=19 // pred_check
          %p244 = pneg %p98
        $region26: #{bayes_mlp_forward.9} parent=19 // pred_check_branch
          %246 = sbr.rel (%p244) target = $region28
        $region27: #{bayes_mlp_forward.9} parent=19 // pred_region
          %s247 = smul.u32 16, %s23
          %p248 = scmp.lt.s32.totalorder %s247, 31
          %s249 = scalar_select %p248, %s247, 31
          %p250 = scmp.lt.s32.totalorder %s22, 0
          %s251 = scalar_select %p250, %s22, 0
          %s252 = sadd.s32 %s251, %s249
          %s253 = smul.addr %s252, 8
          %s254 = scalar_lea.vmem %s2, %s253
          %s255 = smul.u32 16, %s23
        $region28: #{bayes_mlp_forward.9} parent=19 // pred_fallthru
          _
        // Predicated region
        $region29: #{bayes_mlp_forward.9} parent=19 // pred_check
          %p256 = pneg %p126
        $region30: #{bayes_mlp_forward.9} parent=19 // pred_check_branch
          %258 = sbr.rel (%p256) target = $region32
        $region31: #{bayes_mlp_forward.9} parent=19 // pred_region
          %s259 = smul.u32 16, %s23
          %p260 = scmp.lt.s32.totalorder %s259, 31
          %s261 = scalar_select %p260, %s259, 31
          %p262 = scmp.lt.s32.totalorder %s22, 0
          %s263 = scalar_select %p262, %s22, 0
          %s264 = sadd.s32 %s263, %s261
          %s265 = smul.addr %s264, 4
          %s266 = scalar_lea.vmem %s3, %s265
          %s267 = smul.u32 16, %s23
        $region32: #{bayes_mlp_forward.9} parent=19 // pred_fallthru
          _
      $region20: #{bayes_mlp_forward.9} parent=5 // pred_fallthru
        _
      %p268 = scmp.le.s32.totalorder 1, %s15
      %p269 = scmp.lt.s32.totalorder %s15, 3
      %p270 = pnand %p268, %p269
      %p271 = pneg %p270
      // Predicated region
      $region33: #{bayes_mlp_forward.9} parent=5 // pred_check
        _
      $region34: #{bayes_mlp_forward.9} parent=5 // pred_check_branch
        %273 = sbr.rel (%p270) target = $region36
      $region35: #{bayes_mlp_forward.9} parent=5 // pred_region
        %s274 = ssub.s32 %s15, 1
        %p275 = pneg %p48
        %p276 = pneg %p45
        %s277 = smul.u32 16, %s25
        %p278 = scmp.lt.s32.totalorder %s277, 31
        %s279 = scalar_select %p278, %s277, 31
        %p280 = scmp.lt.s32.totalorder %s24, 0
        %s281 = scalar_select %p280, %s24, 0
        %s282 = sadd.s32 %s281, %s279
        %s283 = smul.addr %s282, 8
        %s284 = scalar_lea.vmem %s1, %s283
        %p285 = pneg %p76
        %p286 = pneg %p73
        %s287 = smul.u32 16, %s25
        %p288 = scmp.lt.s32.totalorder %s287, 31
        %s289 = scalar_select %p288, %s287, 31
        %p290 = scmp.lt.s32.totalorder %s24, 0
        %s291 = scalar_select %p290, %s24, 0
        %s292 = sadd.s32 %s291, %s289
        %s293 = smul.addr %s292, 8
        %s294 = scalar_lea.vmem %s2, %s293
        %p295 = pneg %p104
        %p296 = pneg %p101
        %s297 = smul.u32 16, %s25
        %p298 = scmp.lt.s32.totalorder %s297, 31
        %s299 = scalar_select %p298, %s297, 31
        %p300 = scmp.lt.s32.totalorder %s24, 0
        %s301 = scalar_select %p300, %s24, 0
        %s302 = sadd.s32 %s301, %s299
        %s303 = smul.addr %s302, 4
        %s304 = scalar_lea.vmem %s3, %s303
        %p305 = pneg %p132
        %p306 = pneg %p129
        %p307 = pneg %p158
        %p308 = pneg %p155
        %p309 = scmp.lt.s32.totalorder %s24, 0
        %s310 = scalar_select %p309, %s24, 0
        %s311 = smul.addr %s310, 8
        %s312 = scalar_lea.vmem %s4, %s311
        %p313 = pneg %p184
        %p314 = pneg %p181
        %p315 = pneg %p210
        %p316 = pneg %p207
        %s317 = smul.u32 16, %s25
        %p318 = scmp.lt.s32.totalorder %s317, 31
        %s319 = scalar_select %p318, %s317, 31
        %p320 = scmp.lt.s32.totalorder %s24, 0
        %s321 = scalar_select %p320, %s24, 0
        %s322 = sadd.s32 %s321, %s319
        %s323 = smul.addr %s322, 8
        %s324 = scalar_lea.vmem %s1, %s323
        %s325 = smul.u32 16, %s25
        %s326 = smul.u32 16, %s25
        %p327 = scmp.lt.s32.totalorder %s326, 31
        %s328 = scalar_select %p327, %s326, 31
        %p329 = scmp.lt.s32.totalorder %s24, 0
        %s330 = scalar_select %p329, %s24, 0
        %s331 = sadd.s32 %s330, %s328
        %s332 = smul.addr %s331, 8
        %s333 = scalar_lea.vmem %s2, %s332
        %s334 = smul.u32 16, %s25
        %s335 = smul.u32 16, %s25
        %p336 = scmp.lt.s32.totalorder %s335, 31
        %s337 = scalar_select %p336, %s335, 31
        %p338 = scmp.lt.s32.totalorder %s24, 0
        %s339 = scalar_select %p338, %s24, 0
        %s340 = sadd.s32 %s339, %s337
        %s341 = smul.addr %s340, 4
        %s342 = scalar_lea.vmem %s3, %s341
        %s343 = smul.u32 16, %s25
        %p344 = scmp.lt.s32.totalorder %s24, 0
        %s345 = scalar_select %p344, %s24, 0
        %s346 = smul.addr %s345, 8
        %s347 = scalar_lea.vmem %s4, %s346
        %v348 = vld [vmem:[%s324] sm:$0xff]
        %v349 = vld [vmem:[%s324 + $0x8] sm:$0xff]
        %v350 = vld [vmem:[%s324 + $0x10] sm:$0xff]
        %v351 = vld [vmem:[%s324 + $0x18] sm:$0xff]
        %v352 = vld [vmem:[%s324 + $0x20] sm:$0xff]
        %v353 = vld [vmem:[%s324 + $0x28] sm:$0xff]
        %v354 = vld [vmem:[%s324 + $0x30] sm:$0xff]
        %v355 = vld [vmem:[%s324 + $0x38] sm:$0xff]
        %v356 = vld [vmem:[%s324 + $0x40] sm:$0xff]
        %v357 = vld [vmem:[%s324 + $0x48] sm:$0xff]
        %v358 = vld [vmem:[%s324 + $0x50] sm:$0xff]
        %v359 = vld [vmem:[%s324 + $0x58] sm:$0xff]
        %v360 = vld [vmem:[%s324 + $0x60] sm:$0xff]
        %v361 = vld [vmem:[%s324 + $0x68] sm:$0xff]
        %v362 = vld [vmem:[%s324 + $0x70] sm:$0xff]
        %v363 = vld [vmem:[%s324 + $0x78] sm:$0xff]
        %v364 = vld [vmem:[%s333] sm:$0xff]
        %v365 = vld [vmem:[%s333 + $0x8] sm:$0xff]
        %v366 = vld [vmem:[%s333 + $0x10] sm:$0xff]
        %v367 = vld [vmem:[%s333 + $0x18] sm:$0xff]
        %v368 = vld [vmem:[%s333 + $0x20] sm:$0xff]
        %v369 = vld [vmem:[%s333 + $0x28] sm:$0xff]
        %v370 = vld [vmem:[%s333 + $0x30] sm:$0xff]
        %v371 = vld [vmem:[%s333 + $0x38] sm:$0xff]
        %v372 = vld [vmem:[%s333 + $0x40] sm:$0xff]
        %v373 = vld [vmem:[%s333 + $0x48] sm:$0xff]
        %v374 = vld [vmem:[%s333 + $0x50] sm:$0xff]
        %v375 = vld [vmem:[%s333 + $0x58] sm:$0xff]
        %v376 = vld [vmem:[%s333 + $0x60] sm:$0xff]
        %v377 = vld [vmem:[%s333 + $0x68] sm:$0xff]
        %v378 = vld [vmem:[%s333 + $0x70] sm:$0xff]
        %v379 = vld [vmem:[%s333 + $0x78] sm:$0xff]
        %v380 = vmul.f32 %v364, 1.442695
        %v381 = vpow.pop %v380
        %v382 = vmul.f32 %v365, 1.442695
        %v383 = vpow.pop %v382
        %v384 = vmul.f32 %v366, 1.442695
        %v385 = vpow.pop %v384
        %v386 = vmul.f32 %v367, 1.442695
        %v387 = vpow.pop %v386
        %v388 = vmul.f32 %v368, 1.442695
        %v389 = vpow.pop %v388
        %v390 = vmul.f32 %v369, 1.442695
        %v391 = vpow.pop %v390
        %v392 = vmul.f32 %v370, 1.442695
        %v393 = vpow.pop %v392
        %v394 = vmul.f32 %v371, 1.442695
        %v395 = vpow.pop %v394
        %v396 = vmul.f32 %v372, 1.442695
        %v397 = vpow.pop %v396
        %v398 = vmul.f32 %v373, 1.442695
        %v399 = vpow.pop %v398
        %v400 = vmul.f32 %v374, 1.442695
        %v401 = vpow.pop %v400
        %v402 = vmul.f32 %v375, 1.442695
        %v403 = vpow.pop %v402
        %v404 = vmul.f32 %v376, 1.442695
        %v405 = vpow.pop %v404
        %v406 = vmul.f32 %v377, 1.442695
        %v407 = vpow.pop %v406
        %v408 = vmul.f32 %v378, 1.442695
        %v409 = vpow.pop %v408
        %v410 = vmul.f32 %v379, 1.442695
        %v411 = vpow.pop %v410
        %v412 = vadd.f32 %v381, 1.0
        %v413 = vadd.f32 %v383, 1.0
        %v414 = vadd.f32 %v385, 1.0
        %v415 = vadd.f32 %v387, 1.0
        %v416 = vadd.f32 %v389, 1.0
        %v417 = vadd.f32 %v391, 1.0
        %v418 = vadd.f32 %v393, 1.0
        %v419 = vadd.f32 %v395, 1.0
        %v420 = vadd.f32 %v397, 1.0
        %v421 = vadd.f32 %v399, 1.0
        %v422 = vadd.f32 %v401, 1.0
        %v423 = vadd.f32 %v403, 1.0
        %v424 = vadd.f32 %v405, 1.0
        %v425 = vadd.f32 %v407, 1.0
        %v426 = vadd.f32 %v409, 1.0
        %v427 = vadd.f32 %v411, 1.0
        %v428 = vlog2.pop %v412
        %v429 = vmul.f32 %v428, 0.6931472
        %v430 = vlog2.pop %v413
        %v431 = vmul.f32 %v430, 0.6931472
        %v432 = vlog2.pop %v414
        %v433 = vmul.f32 %v432, 0.6931472
        %v434 = vlog2.pop %v415
        %v435 = vmul.f32 %v434, 0.6931472
        %v436 = vlog2.pop %v416
        %v437 = vmul.f32 %v436, 0.6931472
        %v438 = vlog2.pop %v417
        %v439 = vmul.f32 %v438, 0.6931472
        %v440 = vlog2.pop %v418
        %v441 = vmul.f32 %v440, 0.6931472
        %v442 = vlog2.pop %v419
        %v443 = vmul.f32 %v442, 0.6931472
        %v444 = vlog2.pop %v420
        %v445 = vmul.f32 %v444, 0.6931472
        %v446 = vlog2.pop %v421
        %v447 = vmul.f32 %v446, 0.6931472
        %v448 = vlog2.pop %v422
        %v449 = vmul.f32 %v448, 0.6931472
        %v450 = vlog2.pop %v423
        %v451 = vmul.f32 %v450, 0.6931472
        %v452 = vlog2.pop %v424
        %v453 = vmul.f32 %v452, 0.6931472
        %v454 = vlog2.pop %v425
        %v455 = vmul.f32 %v454, 0.6931472
        %v456 = vlog2.pop %v426
        %v457 = vmul.f32 %v456, 0.6931472
        %v458 = vlog2.pop %v427
        %v459 = vmul.f32 %v458, 0.6931472
        %v460 = vrcp.pop %v412
        %v461 = vrcp.pop %v413
        %v462 = vrcp.pop %v414
        %v463 = vrcp.pop %v415
        %v464 = vrcp.pop %v416
        %v465 = vrcp.pop %v417
        %v466 = vrcp.pop %v418
        %v467 = vrcp.pop %v419
        %v468 = vrcp.pop %v420
        %v469 = vrcp.pop %v421
        %v470 = vrcp.pop %v422
        %v471 = vrcp.pop %v423
        %v472 = vrcp.pop %v424
        %v473 = vrcp.pop %v425
        %v474 = vrcp.pop %v426
        %v475 = vrcp.pop %v427
        %v476 = vmul.f32 %v460, %v460
        %v477 = vmul.f32 %v461, %v461
        %v478 = vmul.f32 %v462, %v462
        %v479 = vmul.f32 %v463, %v463
        %v480 = vmul.f32 %v464, %v464
        %v481 = vmul.f32 %v465, %v465
        %v482 = vmul.f32 %v466, %v466
        %v483 = vmul.f32 %v467, %v467
        %v484 = vmul.f32 %v468, %v468
        %v485 = vmul.f32 %v469, %v469
        %v486 = vmul.f32 %v470, %v470
        %v487 = vmul.f32 %v471, %v471
        %v488 = vmul.f32 %v472, %v472
        %v489 = vmul.f32 %v473, %v473
        %v490 = vmul.f32 %v474, %v474
        %v491 = vmul.f32 %v475, %v475
        %v492 = vld [vmem:[%s342] sm:$0xf]
        %v493 = vld [vmem:[%s342 + $0x4] sm:$0xf]
        %v494 = vld [vmem:[%s342 + $0x8] sm:$0xf]
        %v495 = vld [vmem:[%s342 + $0xc] sm:$0xf]
        %v496 = vld [vmem:[%s342 + $0x10] sm:$0xf]
        %v497 = vld [vmem:[%s342 + $0x14] sm:$0xf]
        %v498 = vld [vmem:[%s342 + $0x18] sm:$0xf]
        %v499 = vld [vmem:[%s342 + $0x1c] sm:$0xf]
        %v500 = vld [vmem:[%s342 + $0x20] sm:$0xf]
        %v501 = vld [vmem:[%s342 + $0x24] sm:$0xf]
        %v502 = vld [vmem:[%s342 + $0x28] sm:$0xf]
        %v503 = vld [vmem:[%s342 + $0x2c] sm:$0xf]
        %v504 = vld [vmem:[%s342 + $0x30] sm:$0xf]
        %v505 = vld [vmem:[%s342 + $0x34] sm:$0xf]
        %v506 = vld [vmem:[%s342 + $0x38] sm:$0xf]
        %v507 = vld [vmem:[%s342 + $0x3c] sm:$0xf]
        %v508 = vunpack.c.l.bf16 %v492
        %v509 = vunpack.c.l.bf16 %v493
        %v510 = vunpack.c.l.bf16 %v494
        %v511 = vunpack.c.l.bf16 %v495
        %v512 = vunpack.c.l.bf16 %v496
        %v513 = vunpack.c.l.bf16 %v497
        %v514 = vunpack.c.l.bf16 %v498
        %v515 = vunpack.c.l.bf16 %v499
        %v516 = vunpack.c.l.bf16 %v500
        %v517 = vunpack.c.l.bf16 %v501
        %v518 = vunpack.c.l.bf16 %v502
        %v519 = vunpack.c.l.bf16 %v503
        %v520 = vunpack.c.l.bf16 %v504
        %v521 = vunpack.c.l.bf16 %v505
        %v522 = vunpack.c.l.bf16 %v506
        %v523 = vunpack.c.l.bf16 %v507
        %v524 = vmul.f32 %v429, %v508
        %v525 = vmul.f32 %v431, %v509
        %v526 = vmul.f32 %v433, %v510
        %v527 = vmul.f32 %v435, %v511
        %v528 = vmul.f32 %v437, %v512
        %v529 = vmul.f32 %v439, %v513
        %v530 = vmul.f32 %v441, %v514
        %v531 = vmul.f32 %v443, %v515
        %v532 = vmul.f32 %v445, %v516
        %v533 = vmul.f32 %v447, %v517
        %v534 = vmul.f32 %v449, %v518
        %v535 = vmul.f32 %v451, %v519
        %v536 = vmul.f32 %v453, %v520
        %v537 = vmul.f32 %v455, %v521
        %v538 = vmul.f32 %v457, %v522
        %v539 = vmul.f32 %v459, %v523
        %v540 = vadd.f32 %v348, %v524
        %v541 = vadd.f32 %v349, %v525
        %v542 = vadd.f32 %v350, %v526
        %v543 = vadd.f32 %v351, %v527
        %v544 = vadd.f32 %v352, %v528
        %v545 = vadd.f32 %v353, %v529
        %v546 = vadd.f32 %v354, %v530
        %v547 = vadd.f32 %v355, %v531
        %v548 = vadd.f32 %v356, %v532
        %v549 = vadd.f32 %v357, %v533
        %v550 = vadd.f32 %v358, %v534
        %v551 = vadd.f32 %v359, %v535
        %v552 = vadd.f32 %v360, %v536
        %v553 = vadd.f32 %v361, %v537
        %v554 = vadd.f32 %v362, %v538
        %v555 = vadd.f32 %v363, %v539
        %v556 = vsub.f32 -0.9189385, %v429
        %v557 = vsub.f32 -0.9189385, %v431
        %v558 = vsub.f32 -0.9189385, %v433
        %v559 = vsub.f32 -0.9189385, %v435
        %v560 = vsub.f32 -0.9189385, %v437
        %v561 = vsub.f32 -0.9189385, %v439
        %v562 = vsub.f32 -0.9189385, %v441
        %v563 = vsub.f32 -0.9189385, %v443
        %v564 = vsub.f32 -0.9189385, %v445
        %v565 = vsub.f32 -0.9189385, %v447
        %v566 = vsub.f32 -0.9189385, %v449
        %v567 = vsub.f32 -0.9189385, %v451
        %v568 = vsub.f32 -0.9189385, %v453
        %v569 = vsub.f32 -0.9189385, %v455
        %v570 = vsub.f32 -0.9189385, %v457
        %v571 = vsub.f32 -0.9189385, %v459
        %v572 = vmul.f32 %v524, %v524
        %v573 = vmul.f32 %v525, %v525
        %v574 = vmul.f32 %v526, %v526
        %v575 = vmul.f32 %v527, %v527
        %v576 = vmul.f32 %v528, %v528
        %v577 = vmul.f32 %v529, %v529
        %v578 = vmul.f32 %v530, %v530
        %v579 = vmul.f32 %v531, %v531
        %v580 = vmul.f32 %v532, %v532
        %v581 = vmul.f32 %v533, %v533
        %v582 = vmul.f32 %v534, %v534
        %v583 = vmul.f32 %v535, %v535
        %v584 = vmul.f32 %v536, %v536
        %v585 = vmul.f32 %v537, %v537
        %v586 = vmul.f32 %v538, %v538
        %v587 = vmul.f32 %v539, %v539
        %v588 = vmul.f32 %v572, 0.5
        %v589 = vmul.f32 %v573, 0.5
        %v590 = vmul.f32 %v574, 0.5
        %v591 = vmul.f32 %v575, 0.5
        %v592 = vmul.f32 %v576, 0.5
        %v593 = vmul.f32 %v577, 0.5
        %v594 = vmul.f32 %v578, 0.5
        %v595 = vmul.f32 %v579, 0.5
        %v596 = vmul.f32 %v580, 0.5
        %v597 = vmul.f32 %v581, 0.5
        %v598 = vmul.f32 %v582, 0.5
        %v599 = vmul.f32 %v583, 0.5
        %v600 = vmul.f32 %v584, 0.5
        %v601 = vmul.f32 %v585, 0.5
        %v602 = vmul.f32 %v586, 0.5
        %v603 = vmul.f32 %v587, 0.5
        %v604 = vmul.f32 %v588, %v476
        %v605 = vmul.f32 %v589, %v477
        %v606 = vmul.f32 %v590, %v478
        %v607 = vmul.f32 %v591, %v479
        %v608 = vmul.f32 %v592, %v480
        %v609 = vmul.f32 %v593, %v481
        %v610 = vmul.f32 %v594, %v482
        %v611 = vmul.f32 %v595, %v483
        %v612 = vmul.f32 %v596, %v484
        %v613 = vmul.f32 %v597, %v485
        %v614 = vmul.f32 %v598, %v486
        %v615 = vmul.f32 %v599, %v487
        %v616 = vmul.f32 %v600, %v488
        %v617 = vmul.f32 %v601, %v489
        %v618 = vmul.f32 %v602, %v490
        %v619 = vmul.f32 %v603, %v491
        %v620 = vsub.f32 %v556, %v604
        %v621 = vsub.f32 %v557, %v605
        %v622 = vsub.f32 %v558, %v606
        %v623 = vsub.f32 %v559, %v607
        %v624 = vsub.f32 %v560, %v608
        %v625 = vsub.f32 %v561, %v609
        %v626 = vsub.f32 %v562, %v610
        %v627 = vsub.f32 %v563, %v611
        %v628 = vsub.f32 %v564, %v612
        %v629 = vsub.f32 %v565, %v613
        %v630 = vsub.f32 %v566, %v614
        %v631 = vsub.f32 %v567, %v615
        %v632 = vsub.f32 %v568, %v616
        %v633 = vsub.f32 %v569, %v617
        %v634 = vsub.f32 %v570, %v618
        %v635 = vsub.f32 %v571, %v619
        %v636 = vadd.f32 %v620, %v621
        %v637 = vadd.f32 %v636, %v622
        %v638 = vadd.f32 %v637, %v623
        %v639 = vadd.f32 %v638, %v624
        %v640 = vadd.f32 %v639, %v625
        %v641 = vadd.f32 %v640, %v626
        %v642 = vadd.f32 %v641, %v627
        %v643 = vadd.f32 %v642, %v628
        %v644 = vadd.f32 %v643, %v629
        %v645 = vadd.f32 %v644, %v630
        %v646 = vadd.f32 %v645, %v631
        %v647 = vadd.f32 %v646, %v632
        %v648 = vadd.f32 %v647, %v633
        %v649 = vadd.f32 %v648, %v634
        %v650 = vadd.f32 %v649, %v635
        %651 = vadd.xlane.f32.xlu0 %v650
        %v652 = vpop.xlane.xlu0 %651
        %v653 = vrot.slane %v652, 4
        %v654 = vadd.f32 %v652, %v653
        %v655 = vrot.slane %v654, 2
        %v656 = vadd.f32 %v654, %v655
        %v657 = vrot.slane %v656, 1
        %v658 = vadd.f32 %v656, %v657
        %s659 = vtos %v658
        %v660 = vstv %s659
        %v661 = vmul.f32 %v540, %v540
        %v662 = vmul.f32 %v541, %v541
        %v663 = vmul.f32 %v542, %v542
        %v664 = vmul.f32 %v543, %v543
        %v665 = vmul.f32 %v544, %v544
        %v666 = vmul.f32 %v545, %v545
        %v667 = vmul.f32 %v546, %v546
        %v668 = vmul.f32 %v547, %v547
        %v669 = vmul.f32 %v548, %v548
        %v670 = vmul.f32 %v549, %v549
        %v671 = vmul.f32 %v550, %v550
        %v672 = vmul.f32 %v551, %v551
        %v673 = vmul.f32 %v552, %v552
        %v674 = vmul.f32 %v553, %v553
        %v675 = vmul.f32 %v554, %v554
        %v676 = vmul.f32 %v555, %v555
        %v677 = vmul.f32 %v661, -0.5
        %v678 = vmul.f32 %v662, -0.5
        %v679 = vmul.f32 %v663, -0.5
        %v680 = vmul.f32 %v664, -0.5
        %v681 = vmul.f32 %v665, -0.5
        %v682 = vmul.f32 %v666, -0.5
        %v683 = vmul.f32 %v667, -0.5
        %v684 = vmul.f32 %v668, -0.5
        %v685 = vmul.f32 %v669, -0.5
        %v686 = vmul.f32 %v670, -0.5
        %v687 = vmul.f32 %v671, -0.5
        %v688 = vmul.f32 %v672, -0.5
        %v689 = vmul.f32 %v673, -0.5
        %v690 = vmul.f32 %v674, -0.5
        %v691 = vmul.f32 %v675, -0.5
        %v692 = vmul.f32 %v676, -0.5
        %v693 = vmul.f32 %v661, -124999.5
        %v694 = vmul.f32 %v662, -124999.5
        %v695 = vmul.f32 %v663, -124999.5
        %v696 = vmul.f32 %v664, -124999.5
        %v697 = vmul.f32 %v665, -124999.5
        %v698 = vmul.f32 %v666, -124999.5
        %v699 = vmul.f32 %v667, -124999.5
        %v700 = vmul.f32 %v668, -124999.5
        %v701 = vmul.f32 %v669, -124999.5
        %v702 = vmul.f32 %v670, -124999.5
        %v703 = vmul.f32 %v671, -124999.5
        %v704 = vmul.f32 %v672, -124999.5
        %v705 = vmul.f32 %v673, -124999.5
        %v706 = vmul.f32 %v674, -124999.5
        %v707 = vmul.f32 %v675, -124999.5
        %v708 = vmul.f32 %v676, -124999.5
        %v709 = vmul.f32 %v693, 1.442695
        %v710 = vpow.pop %v709
        %v711 = vmul.f32 %v694, 1.442695
        %v712 = vpow.pop %v711
        %v713 = vmul.f32 %v695, 1.442695
        %v714 = vpow.pop %v713
        %v715 = vmul.f32 %v696, 1.442695
        %v716 = vpow.pop %v715
        %v717 = vmul.f32 %v697, 1.442695
        %v718 = vpow.pop %v717
        %v719 = vmul.f32 %v698, 1.442695
        %v720 = vpow.pop %v719
        %v721 = vmul.f32 %v699, 1.442695
        %v722 = vpow.pop %v721
        %v723 = vmul.f32 %v700, 1.442695
        %v724 = vpow.pop %v723
        %v725 = vmul.f32 %v701, 1.442695
        %v726 = vpow.pop %v725
        %v727 = vmul.f32 %v702, 1.442695
        %v728 = vpow.pop %v727
        %v729 = vmul.f32 %v703, 1.442695
        %v730 = vpow.pop %v729
        %v731 = vmul.f32 %v704, 1.442695
        %v732 = vpow.pop %v731
        %v733 = vmul.f32 %v705, 1.442695
        %v734 = vpow.pop %v733
        %v735 = vmul.f32 %v706, 1.442695
        %v736 = vpow.pop %v735
        %v737 = vmul.f32 %v707, 1.442695
        %v738 = vpow.pop %v737
        %v739 = vmul.f32 %v708, 1.442695
        %v740 = vpow.pop %v739
        %v741 = vmul.f32 %v710, 250.0
        %v742 = vmul.f32 %v712, 250.0
        %v743 = vmul.f32 %v714, 250.0
        %v744 = vmul.f32 %v716, 250.0
        %v745 = vmul.f32 %v718, 250.0
        %v746 = vmul.f32 %v720, 250.0
        %v747 = vmul.f32 %v722, 250.0
        %v748 = vmul.f32 %v724, 250.0
        %v749 = vmul.f32 %v726, 250.0
        %v750 = vmul.f32 %v728, 250.0
        %v751 = vmul.f32 %v730, 250.0
        %v752 = vmul.f32 %v732, 250.0
        %v753 = vmul.f32 %v734, 250.0
        %v754 = vmul.f32 %v736, 250.0
        %v755 = vmul.f32 %v738, 250.0
        %v756 = vmul.f32 %v740, 250.0
        %v757 = vadd.f32 %v741, 0.5
        %v758 = vadd.f32 %v742, 0.5
        %v759 = vadd.f32 %v743, 0.5
        %v760 = vadd.f32 %v744, 0.5
        %v761 = vadd.f32 %v745, 0.5
        %v762 = vadd.f32 %v746, 0.5
        %v763 = vadd.f32 %v747, 0.5
        %v764 = vadd.f32 %v748, 0.5
        %v765 = vadd.f32 %v749, 0.5
        %v766 = vadd.f32 %v750, 0.5
        %v767 = vadd.f32 %v751, 0.5
        %v768 = vadd.f32 %v752, 0.5
        %v769 = vadd.f32 %v753, 0.5
        %v770 = vadd.f32 %v754, 0.5
        %v771 = vadd.f32 %v755, 0.5
        %v772 = vadd.f32 %v756, 0.5
        %v773 = vlog2.pop %v757
        %v774 = vmul.f32 %v773, 0.6931472
        %v775 = vlog2.pop %v758
        %v776 = vmul.f32 %v775, 0.6931472
        %v777 = vlog2.pop %v759
        %v778 = vmul.f32 %v777, 0.6931472
        %v779 = vlog2.pop %v760
        %v780 = vmul.f32 %v779, 0.6931472
        %v781 = vlog2.pop %v761
        %v782 = vmul.f32 %v781, 0.6931472
        %v783 = vlog2.pop %v762
        %v784 = vmul.f32 %v783, 0.6931472
        %v785 = vlog2.pop %v763
        %v786 = vmul.f32 %v785, 0.6931472
        %v787 = vlog2.pop %v764
        %v788 = vmul.f32 %v787, 0.6931472
        %v789 = vlog2.pop %v765
        %v790 = vmul.f32 %v789, 0.6931472
        %v791 = vlog2.pop %v766
        %v792 = vmul.f32 %v791, 0.6931472
        %v793 = vlog2.pop %v767
        %v794 = vmul.f32 %v793, 0.6931472
        %v795 = vlog2.pop %v768
        %v796 = vmul.f32 %v795, 0.6931472
        %v797 = vlog2.pop %v769
        %v798 = vmul.f32 %v797, 0.6931472
        %v799 = vlog2.pop %v770
        %v800 = vmul.f32 %v799, 0.6931472
        %v801 = vlog2.pop %v771
        %v802 = vmul.f32 %v801, 0.6931472
        %v803 = vlog2.pop %v772
        %v804 = vmul.f32 %v803, 0.6931472
        %v805 = vadd.f32 %v677, %v774
        %v806 = vadd.f32 %v678, %v776
        %v807 = vadd.f32 %v679, %v778
        %v808 = vadd.f32 %v680, %v780
        %v809 = vadd.f32 %v681, %v782
        %v810 = vadd.f32 %v682, %v784
        %v811 = vadd.f32 %v683, %v786
        %v812 = vadd.f32 %v684, %v788
        %v813 = vadd.f32 %v685, %v790
        %v814 = vadd.f32 %v686, %v792
        %v815 = vadd.f32 %v687, %v794
        %v816 = vadd.f32 %v688, %v796
        %v817 = vadd.f32 %v689, %v798
        %v818 = vadd.f32 %v690, %v800
        %v819 = vadd.f32 %v691, %v802
        %v820 = vadd.f32 %v692, %v804
        %v821 = vadd.f32 %v805, %v806
        %v822 = vadd.f32 %v821, %v807
        %v823 = vadd.f32 %v822, %v808
        %v824 = vadd.f32 %v823, %v809
        %v825 = vadd.f32 %v824, %v810
        %v826 = vadd.f32 %v825, %v811
        %v827 = vadd.f32 %v826, %v812
        %v828 = vadd.f32 %v827, %v813
        %v829 = vadd.f32 %v828, %v814
        %v830 = vadd.f32 %v829, %v815
        %v831 = vadd.f32 %v830, %v816
        %v832 = vadd.f32 %v831, %v817
        %v833 = vadd.f32 %v832, %v818
        %v834 = vadd.f32 %v833, %v819
        %v835 = vadd.f32 %v834, %v820
        %836 = vadd.xlane.f32.xlu0 %v835
        %v837 = vpop.xlane.xlu0 %836
        %v838 = vrot.slane %v837, 4
        %v839 = vadd.f32 %v837, %v838
        %v840 = vrot.slane %v839, 2
        %v841 = vadd.f32 %v839, %v840
        %v842 = vrot.slane %v841, 1
        %v843 = vadd.f32 %v841, %v842
        %s844 = vtos %v843
        %v845 = vstv %s844
        %s846 = smul.u32 %s25, 128
        %s847 = sshra.s32 %s846, 7
        %s848 = sand.u32 %s846, 127
        %s849 = smul.addr %s847, 8
        %s850 = scalar_lea.vmem %s0, %s849
        %v851 = vld [vmem:[%s850] sm:$0xff]
        %852 = vmatprep.subr.mxu0 0.0
        %853 = vmatpush1.msra.mxu0 %v540
        %854 = vmatprep.subr.mxu0 0.0
        %855 = vmatpush1.msra.mxu0 %v541
        %856 = vmatprep.subr.mxu0 0.0
        %857 = vmatpush1.msra.mxu0 %v542
        %858 = vmatprep.subr.mxu0 0.0
        %859 = vmatpush1.msra.mxu0 %v543
        %860 = vmatprep.subr.mxu0 0.0
        %861 = vmatpush1.msra.mxu0 %v544
        %862 = vmatprep.subr.mxu0 0.0
        %863 = vmatpush1.msra.mxu0 %v545
        %864 = vmatprep.subr.mxu0 0.0
        %865 = vmatpush1.msra.mxu0 %v546
        %866 = vmatprep.subr.mxu0 0.0
        %867 = vmatpush1.msra.mxu0 %v547
        %868 = vmatprep.subr.mxu0 0.0
        %869 = vmatpush1.msra.mxu0 %v548
        %870 = vmatprep.subr.mxu0 0.0
        %871 = vmatpush1.msra.mxu0 %v549
        %872 = vmatprep.subr.mxu0 0.0
        %873 = vmatpush1.msra.mxu0 %v550
        %874 = vmatprep.subr.mxu0 0.0
        %875 = vmatpush1.msra.mxu0 %v551
        %876 = vmatprep.subr.mxu0 0.0
        %877 = vmatpush1.msra.mxu0 %v552
        %878 = vmatprep.subr.mxu0 0.0
        %879 = vmatpush1.msra.mxu0 %v553
        %880 = vmatprep.subr.mxu0 0.0
        %881 = vmatpush1.msra.mxu0 %v554
        %882 = vmatprep.subr.mxu0 0.0
        %883 = vmatpush1.msra.mxu0 %v555
        %884 = vmatprep.subr.mxu0 0.0
        %885 = vmatpush1.msra.mxu0 0.0
        %886 = vmatprep.subr.mxu0 0.0
        %887 = vmatpush1.msra.mxu0 0.0
        %888 = vmatprep.subr.mxu0 0.0
        %889 = vmatpush1.msra.mxu0 0.0
        %890 = vmatprep.subr.mxu0 0.0
        %891 = vmatpush1.msra.mxu0 0.0
        %892 = vmatprep.subr.mxu0 0.0
        %893 = vmatpush1.msra.mxu0 0.0
        %894 = vmatprep.subr.mxu0 0.0
        %895 = vmatpush1.msra.mxu0 0.0
        %896 = vmatprep.subr.mxu0 0.0
        %897 = vmatpush1.msra.mxu0 0.0
        %898 = vmatprep.subr.mxu0 0.0
        %899 = vmatpush1.msra.mxu0 0.0
        %900 = vmatprep.subr.mxu0 0.0
        %901 = vmatpush1.msra.mxu0 0.0
        %902 = vmatprep.subr.mxu0 0.0
        %903 = vmatpush1.msra.mxu0 0.0
        %904 = vmatprep.subr.mxu0 0.0
        %905 = vmatpush1.msra.mxu0 0.0
        %906 = vmatprep.subr.mxu0 0.0
        %907 = vmatpush1.msra.mxu0 0.0
        %908 = vmatprep.subr.mxu0 0.0
        %909 = vmatpush1.msra.mxu0 0.0
        %910 = vmatprep.subr.mxu0 0.0
        %911 = vmatpush1.msra.mxu0 0.0
        %912 = vmatprep.subr.mxu0 0.0
        %913 = vmatpush1.msra.mxu0 0.0
        %914 = vmatprep.subr.mxu0 0.0
        %915 = vmatpush1.msra.mxu0 0.0
        %916 = vmatprep.mubr.f32.mxu0 0.0
        %917 = vmatmul.mubr.f32.gmra.mrb[0].mxu0 %v851
        %v918 = vpop.f32.mrb[0].mxu0
        %v919 = vadd.f32 0.0, %v918
        %v920 = vpop.f32.mrb[0].mxu0
        %921 = vdwg.mxu0
        %p922 = scmp.eq.s32.totalorder %s25, 0
        // Predicated region
        $region37: #{bayes_mlp_forward.9} parent=35 // pred_check
          %p923 = pneg %p922
        $region38: #{bayes_mlp_forward.9} parent=35 // pred_check_branch
          %925 = sbr.rel (%p923) target = $region40
        $region39: #{bayes_mlp_forward.9} parent=35 // pred_region
          %vm926 = vcmask 0
          %927 = vst.msk [vmem:[#allocation2] sm:$0x1] %vm926, %v660
          %928 = vst.msk [vmem:[#allocation3] sm:$0x1] %vm926, %v845
          %929 = vst [vmem:[%s347] sm:$0xff] %v919
        $region40: #{bayes_mlp_forward.9} parent=35 // pred_fallthru
          _
        %p930 = scmp.ne.s32.totalorder %s25, 0
        // Predicated region
        $region41: #{bayes_mlp_forward.9} parent=35 // pred_check
          %p931 = pneg %p930
        $region42: #{bayes_mlp_forward.9} parent=35 // pred_check_branch
          %933 = sbr.rel (%p931) target = $region44
        $region43: #{bayes_mlp_forward.9} parent=35 // pred_region
          %v934 = vld [vmem:[#allocation2] sm:$0x1]
          %v935 = vadd.f32 %v934, %v660
          %vm936 = vcmask 0
          %937 = vst.msk [vmem:[#allocation2] sm:$0x1] %vm936, %v935
          %v938 = vld [vmem:[#allocation3] sm:$0x1]
          %v939 = vadd.f32 %v938, %v845
          %940 = vst.msk [vmem:[#allocation3] sm:$0x1] %vm936, %v939
          %v941 = vld [vmem:[%s347] sm:$0xff]
          %v942 = vadd.f32 %v941, %v919
          %943 = vst [vmem:[%s347] sm:$0xff] %v942
        $region44: #{bayes_mlp_forward.9} parent=35 // pred_fallthru
          _
        %p944 = scmp.eq.s32.totalorder %s25, 1
        // Predicated region
        $region45: #{bayes_mlp_forward.9} parent=35 // pred_check
          %p945 = pneg %p944
        $region46: #{bayes_mlp_forward.9} parent=35 // pred_check_branch
          %947 = sbr.rel (%p945) target = $region48
        $region47: #{bayes_mlp_forward.9} parent=35 // pred_region
          %v948 = vld [vmem:[#allocation2] sm:$0x1]
          %vm949 = vcmask 0
          %950 = vst.msk [vmem:[#allocation4] sm:$0x1] %vm949, %v948
          %v951 = vld [vmem:[#allocation3] sm:$0x1]
          %952 = vst.msk [vmem:[#allocation6] sm:$0x1] %vm949, %v951
        $region48: #{bayes_mlp_forward.9} parent=35 // pred_fallthru
          _
        %p953 = scmp.lt.s32.totalorder %s24, 0
        %s954 = scalar_select %p953, %s24, 0
        %s955 = smul.addr %s954, 8
        %s956 = scalar_lea.vmem %s4, %s955
        // Predicated region
        $region49: #{bayes_mlp_forward.9} parent=35 // pred_check
          %p957 = pneg %p155
        $region50: #{bayes_mlp_forward.9} parent=35 // pred_check_branch
          %959 = sbr.rel (%p957) target = $region52
        $region51: #{bayes_mlp_forward.9} parent=35 // pred_region
          _
        $region52: #{bayes_mlp_forward.9} parent=35 // pred_fallthru
          _
        // Predicated region
        $region53: #{bayes_mlp_forward.9} parent=35 // pred_check
          %p960 = pneg %p181
        $region54: #{bayes_mlp_forward.9} parent=35 // pred_check_branch
          %962 = sbr.rel (%p960) target = $region56
        $region55: #{bayes_mlp_forward.9} parent=35 // pred_region
          %s964 = ssub.s32 16, 16
          %965 = vsyncadd [#allocation5], %s964
          %s966 = smul.addr %s24, 16
          %s967 = scalar_lea.hbm %s5, %s966
          %s969 = sshll.u32 [#allocation4], 4
          %s970 = int_to_ptr.vmem [resolvable:$true] %s969
          %972 = dma.vmem_to_hbm [thread:$0]  %s970, 16, %s967, [#allocation5]
        $region56: #{bayes_mlp_forward.9} parent=35 // pred_fallthru
          _
        // Predicated region
        $region57: #{bayes_mlp_forward.9} parent=35 // pred_check
          %p973 = pneg %p207
        $region58: #{bayes_mlp_forward.9} parent=35 // pred_check_branch
          %975 = sbr.rel (%p973) target = $region60
        $region59: #{bayes_mlp_forward.9} parent=35 // pred_region
          %s977 = ssub.s32 16, 16
          %978 = vsyncadd [#allocation7], %s977
          %s979 = smul.addr %s24, 16
          %s980 = scalar_lea.hbm %s6, %s979
          %s982 = sshll.u32 [#allocation6], 4
          %s983 = int_to_ptr.vmem [resolvable:$true] %s982
          %985 = dma.vmem_to_hbm [thread:$0]  %s983, 16, %s980, [#allocation7]
        $region60: #{bayes_mlp_forward.9} parent=35 // pred_fallthru
          _
        // Predicated region
        $region61: #{bayes_mlp_forward.9} parent=35 // pred_check
          %p986 = pneg %p155
        $region62: #{bayes_mlp_forward.9} parent=35 // pred_check_branch
          %988 = sbr.rel (%p986) target = $region64
        $region63: #{bayes_mlp_forward.9} parent=35 // pred_region
          %p989 = scmp.lt.s32.totalorder %s24, 0
          %s990 = scalar_select %p989, %s24, 0
          %s991 = smul.addr %s990, 8
          %s992 = scalar_lea.vmem %s4, %s991
        $region64: #{bayes_mlp_forward.9} parent=35 // pred_fallthru
          _
        // Predicated region
        $region65: #{bayes_mlp_forward.9} parent=35 // pred_check
          %p993 = pneg %p181
        $region66: #{bayes_mlp_forward.9} parent=35 // pred_check_branch
          %995 = sbr.rel (%p993) target = $region68
        $region67: #{bayes_mlp_forward.9} parent=35 // pred_region
          %996 = dma.done [#allocation5], 16
        $region68: #{bayes_mlp_forward.9} parent=35 // pred_fallthru
          _
        // Predicated region
        $region69: #{bayes_mlp_forward.9} parent=35 // pred_check
          %p997 = pneg %p207
        $region70: #{bayes_mlp_forward.9} parent=35 // pred_check_branch
          %999 = sbr.rel (%p997) target = $region72
        $region71: #{bayes_mlp_forward.9} parent=35 // pred_region
          %1000 = dma.done [#allocation7], 16
        $region72: #{bayes_mlp_forward.9} parent=35 // pred_fallthru
          _
      $region36: #{bayes_mlp_forward.9} parent=5 // pred_fallthru
        _
      %p1001 = scmp.le.s32.totalorder 2, %s15
      // Predicated region
      $region73: #{bayes_mlp_forward.9} parent=5 // pred_check
        %p1002 = pneg %p1001
      $region74: #{bayes_mlp_forward.9} parent=5 // pred_check_branch
        %1004 = sbr.rel (%p1002) target = $region76
      $region75: #{bayes_mlp_forward.9} parent=5 // pred_region
        %s1005 = ssub.s32 %s15, 2
      $region76: #{bayes_mlp_forward.9} parent=5 // pred_fallthru
        _
    $region6: #{bayes_mlp_forward.9} parent=1 // loop_footer
      %s19 = sadd.s32 1, %s15
    $region7: #{bayes_mlp_forward.9} parent=1 // loop_footer_branch
      %14 = sbr.rel target = $region3
    $region8: #{bayes_mlp_forward.9} parent=1 // loop_exit
      _
    %1006 = vsyncpa [#allocation5], 1
    %s1007 = scalar_lea.sflag [#allocation5], 1
    %1008 = vsyncpa %s1007, 1
    %1009 = vsyncpa [#allocation7], 1

</llo_original>
